<compile_context>
chip_gen: v6e
topology: v6e:2x2x1
jax: 0.10.0
libtpu: 0.0.40
codegen_flags: <defaults>
</compile_context>

<pallas_src>
import functools
import math

import jax
import jax.numpy as jnp
from jax import lax
from jax.experimental import pallas as pl
from jax.experimental.pallas import tpu as pltpu


def _round_up(x, m):
    return ((x + m - 1) // m) * m


def _nbytes(shape, dtype):
    return int(math.prod(shape)) * jnp.dtype(dtype).itemsize


def _vmem_limit(total_bytes):
    # Footprint + generous headroom, clamped to a value legal on every chip
    # (v5e 16 MiB scoped default / 128 MiB phys, v6e 32/128, v7x 32/64).
    return int(min(max(2 * total_bytes + (8 << 20), 32 << 20), 48 << 20))


# ----------------------------------------------------------------------------
# Pallas kernel 1: multi-layer LSTM recurrence
# ----------------------------------------------------------------------------
def lstm_recurrence_kernel(x_ref, h0_ref, c0_ref, wih_ref, whh_ref, bias_ref,
                           hbuf_ref, gx_ref, *, n_layers, seq_len, hidden_size):
    H = hidden_size
    T = seq_len
    Bp = x_ref.shape[1]                       # sublane-padded batch

    # Lane mask selecting the g (cell candidate) gate inside the 4H lanes.
    # PyTorch gate order along 4H: input, forget, cell(g), output.
    lane = lax.broadcasted_iota(jnp.int32, (Bp, 4 * H), 1)
    g_mask = jnp.logical_and(lane >= 2 * H, lane < 3 * H)
    # sigmoid(x) = 0.5 * (1 + tanh(x/2)): pre-scale the non-g lanes by 0.5 so
    # a single tanh over the full vreg serves all four gates.  Hoisted so no
    # broadcast is re-materialized inside the serial loop.
    pre_scale = jnp.where(g_mask, 1.0, 0.5)

    # NOTE: stacked per-layer w_ih assumes input_size == hidden_size
    # (asserted in the wrapper; true for event_emsize + chord_emsize == H).
    for layer in range(n_layers):                       # static: n_layers tiny
        w_ih_t = wih_ref[layer]                         # (Din, 4H) bf16, pre-T
        w_hh_t = whh_ref[layer]                         # (H,   4H) bf16, pre-T
        bias = bias_ref[layer]                          # (1, 4H) f32 = bih+bhh

        # ---- input projection hoisted out of the time loop -----------------
        # One big bf16 (T*Bp, Din) x (Din, 4H) MXU matmul per layer, with the
        # bias folded in so step() never re-adds it.
        lin = x_ref[...] if layer == 0 else hbuf_ref[...]       # (T,Bp,Din) bf16
        gx = jnp.dot(lin.reshape(T * Bp, lin.shape[-1]), w_ih_t,
                     preferred_element_type=jnp.float32) + bias  # (T*Bp, 4H)
        gx_ref[...] = gx.reshape(T, Bp, 4 * H).astype(gx_ref.dtype)

        # ---- serial recurrence: only h @ W_hh + gate math on the critical path
        # TODO(synk): hold W_hh resident in the MXU across the T loop via
        # pltpu.matmul_push_rhs / matmul_acc_lhs / matmul_pop instead of
        # re-pushing the weights through jnp.dot every step.
        def step(t, carry):
            h, c = carry
            gates = gx_ref[t] + jnp.dot(h.astype(jnp.bfloat16), w_hh_t,
                                        preferred_element_type=jnp.float32)
            y = jnp.tanh(gates * pre_scale)                  # single EUP op
            act = jnp.where(g_mask, y, 0.5 * (1.0 + y))      # sigmoid lanes
            i_g = act[:, 0 * H:1 * H]
            f_g = act[:, 1 * H:2 * H]
            g_g = act[:, 2 * H:3 * H]
            o_g = act[:, 3 * H:4 * H]
            c_new = f_g * c + i_g * g_g
            h_new = o_g * jnp.tanh(c_new)
            hbuf_ref[t] = h_new.astype(hbuf_ref.dtype)       # bounded live range
            return h_new, c_new

        # unroll=True: T is small here; use a partial unroll (4-8) at large T.
        lax.fori_loop(0, T, step, (h0_ref[layer], c0_ref[layer]), unroll=True)
        # NOTE: inter-layer dropout is identity (dropout=0.0).


# ----------------------------------------------------------------------------
# Pallas kernel 2: decoder projection (grid-tiled over vocab lanes)
# ----------------------------------------------------------------------------
def decoder_kernel(h_ref, w_ref, b_ref, y_ref):
    logits = jnp.dot(h_ref[...], w_ref[...],
                     preferred_element_type=jnp.float32) + b_ref[...]
    y_ref[...] = logits.astype(y_ref.dtype)


# ----------------------------------------------------------------------------
# Wrapper: embedding glue, host-side weight prep / padding, pallas_calls
# ----------------------------------------------------------------------------
def lstm_model_forward(input_event, input_chord, params, *,
                       n_layers, seq_len, hidden_size, events_size):
    H = hidden_size
    # Embedding lookups + concat (glue; matches event_encoder/chord_encoder).
    event_emb = params["event_encoder"][input_event]        # (T, B, E)
    chord_emb = params["chord_encoder"][input_chord]        # (T, B, C)
    x = jnp.concatenate([event_emb, chord_emb], axis=2)     # (T, B, Din)

    T, B, Din = x.shape
    if Din != H:
        # Stacked (L, Din, 4H) w_ih layout assumes input_size == hidden_size.
        raise ValueError("event_emsize + chord_emsize must equal hidden_size "
                         "for the stacked per-layer weight layout")
    Bp = _round_up(B, 8)                 # sublane-dense batch
    Vp = _round_up(events_size, 128)     # lane-dense vocab (unmasked stores)
    # TODO(synk): for production configs pad H to a multiple of 128 so the
    # per-gate slices and (Bp, H) cell math stay lane-tile aligned.

    # ---- host-side prep: pad, pre-transpose, pre-sum biases, bf16 cast ------
    x_p = jnp.pad(x, ((0, 0), (0, Bp - B), (0, 0))).astype(jnp.bfloat16)
    h0_p = jnp.pad(params["h0"], ((0, 0), (0, Bp - B), (0, 0)))
    c0_p = jnp.pad(params["c0"], ((0, 0), (0, Bp - B), (0, 0)))
    w_ih_t = jnp.transpose(params["w_ih"], (0, 2, 1)).astype(jnp.bfloat16)
    w_hh_t = jnp.transpose(params["w_hh"], (0, 2, 1)).astype(jnp.bfloat16)
    bias = (params["b_ih"] + params["b_hh"]).astype(jnp.float32)   # (L, 1, 4H)
    wdec_t = jnp.pad(params["decoder_w"].T,
                     ((0, 0), (0, Vp - events_size))).astype(jnp.bfloat16)
    bdec = jnp.pad(params["decoder_b"],
                   ((0, 0), (0, Vp - events_size)))                # (1, Vp) f32

    vmem = pl.BlockSpec(memory_space=pltpu.MemorySpace.VMEM)

    # ---------------- Call 1: multi-layer LSTM recurrence --------------------
    rec_kernel = functools.partial(
        lstm_recurrence_kernel, n_layers=n_layers, seq_len=T, hidden_size=H)
    rec_bytes = (_nbytes((T, Bp, Din), jnp.bfloat16)
                 + 2 * _nbytes((n_layers, Bp, H), jnp.float32)
                 + _nbytes((n_layers, Din, 4 * H), jnp.bfloat16)
                 + _nbytes((n_layers, H, 4 * H), jnp.bfloat16)
                 + _nbytes((n_layers, 1, 4 * H), jnp.float32)
                 + _nbytes((T, Bp, H), jnp.bfloat16)               # hbuf out
                 + _nbytes((T, Bp, 4 * H), jnp.bfloat16))          # gx scratch
    # TODO(synk): at production (T, H) add a grid over T (stream gx / hbuf
    # through VMEM) and split the padded batch across a parallel leading grid
    # axis so both v7x TensorCores run the recurrence (needs Bp >= 16).
    hbuf = pl.pallas_call(
        rec_kernel,
        out_shape=jax.ShapeDtypeStruct((T, Bp, H), jnp.bfloat16),
        in_specs=[vmem] * 6,
        out_specs=vmem,
        scratch_shapes=[pltpu.VMEM((T, Bp, 4 * H), jnp.bfloat16)],
        compiler_params=pltpu.CompilerParams(
            vmem_limit_bytes=_vmem_limit(rec_bytes)),
    )(x_p, h0_p, c0_p, w_ih_t, w_hh_t, bias)

    # ---------------- Call 2: decoder projection, Vp-tiled -------------------
    TV = 128
    rows = T * Bp
    hbuf_flat = hbuf.reshape(rows, H)                    # lstm_out.view(T*B, H)
    dec_bytes = (_nbytes((rows, H), jnp.bfloat16)
                 + 2 * (_nbytes((H, TV), jnp.bfloat16)
                        + _nbytes((1, TV), jnp.float32)
                        + _nbytes((rows, TV), jnp.float32)))
    # TODO(synk): emit logits in bf16 to halve HBM writeback if the consumer
    # permits; kept f32 here to match the PyTorch module's output dtype.
    logits = pl.pallas_call(
        decoder_kernel,
        out_shape=jax.ShapeDtypeStruct((rows, Vp), jnp.float32),
        grid_spec=pltpu.PrefetchScalarGridSpec(
            num_scalar_prefetch=0, grid=(Vp // TV,),
            in_specs=[pl.BlockSpec((rows, H), lambda j: (0, 0)),
                      pl.BlockSpec((H, TV), lambda j: (0, j)),
                      pl.BlockSpec((1, TV), lambda j: (0, j))],
            out_specs=pl.BlockSpec((rows, TV), lambda j: (0, j))),
        compiler_params=pltpu.CompilerParams(
            dimension_semantics=("parallel",),
            vmem_limit_bytes=_vmem_limit(dec_bytes)),
    )(hbuf_flat, wdec_t, bdec)

    y_p = logits.reshape(T, Bp, Vp)
    return y_p[:, :B, :events_size]


# ----------------------------------------------------------------------------
# Pure-JAX f32 reference (same math) for verification
# ----------------------------------------------------------------------------
def reference_forward(input_event, input_chord, params, *,
                      n_layers, seq_len, hidden_size):
    H = hidden_size
    event_emb = params["event_encoder"][input_event]
    chord_emb = params["chord_encoder"][input_chord]
    layer_in = jnp.concatenate([event_emb, chord_emb], axis=2)
    for layer in range(n_layers):
        w_ih = params["w_ih"][layer]
        w_hh = params["w_hh"][layer]
        bias = params["b_ih"][layer] + params["b_hh"][layer]
        h = params["h0"][layer]
        c = params["c0"][layer]
        outs = []
        for t in range(seq_len):
            gates = layer_in[t] @ w_ih.T + h @ w_hh.T + bias
            i_g = jax.nn.sigmoid(gates[:, 0 * H:1 * H])
            f_g = jax.nn.sigmoid(gates[:, 1 * H:2 * H])
            g_g = jnp.tanh(gates[:, 2 * H:3 * H])
            o_g = jax.nn.sigmoid(gates[:, 3 * H:4 * H])
            c = f_g * c + i_g * g_g
            h = o_g * jnp.tanh(c)
            outs.append(h)
        layer_in = jnp.stack(outs, axis=0)
    T, B, _ = layer_in.shape
    flat = layer_in.reshape(T * B, H)
    logits = flat @ params["decoder_w"].T + params["decoder_b"]
    return logits.reshape(T, B, -1)


# ----------------------------------------------------------------------------
# Deterministic parameter construction (mirrors __init__ / init_weights)
# ----------------------------------------------------------------------------
def make_params(key, *, event_emsize, chord_emsize, events_size, chords_size,
                hidden_size, n_layers, batch_size):
    ks = jax.random.split(key, 10)
    input_size = event_emsize + chord_emsize
    H = hidden_size
    k_lstm = 1.0 / math.sqrt(H)           # PyTorch default LSTM init bound
    params = {
        "event_encoder": 0.01 * jax.random.normal(
            ks[0], (events_size, event_emsize), jnp.float32),
        "chord_encoder": 0.01 * jax.random.normal(
            ks[1], (chords_size, chord_emsize), jnp.float32),
        "decoder_w": 0.01 * jax.random.normal(
            ks[2], (events_size, H), jnp.float32),
        "decoder_b": jnp.zeros((1, events_size), jnp.float32),
        # LSTM params (input_size == hidden_size so all layers stack cleanly)
        "w_ih": jax.random.uniform(
            ks[3], (n_layers, 4 * H, input_size), jnp.float32,
            minval=-k_lstm, maxval=k_lstm),
        "w_hh": jax.random.uniform(
            ks[4], (n_layers, 4 * H, H), jnp.float32,
            minval=-k_lstm, maxval=k_lstm),
        "b_ih": jax.random.uniform(
            ks[5], (n_layers, 1, 4 * H), jnp.float32,
            minval=-k_lstm, maxval=k_lstm),
        "b_hh": jax.random.uniform(
            ks[6], (n_layers, 1, 4 * H), jnp.float32,
            minval=-k_lstm, maxval=k_lstm),
    }
    # init_hidden(): xavier_uniform over (n_layers, batch, hidden)
    bound = math.sqrt(6.0 / (batch_size * H + n_layers * H))
    params["h0"] = jax.random.uniform(
        ks[7], (n_layers, batch_size, H), jnp.float32, minval=-bound, maxval=bound)
    params["c0"] = jax.random.uniform(
        ks[8], (n_layers, batch_size, H), jnp.float32, minval=-bound, maxval=bound)
    return params


if __name__ == "__main__":
    # Small, module-consistent config
    event_emsize = 16
    chord_emsize = 16
    hidden_size = 32            # == event_emsize + chord_emsize (layers stack)
    n_layers = 2
    events_size = 48
    chords_size = 24
    seq_len = 8
    batch_size = 4
    # dropout = 0.0 (identity), tie_weights = False, cell = 'lstm'

    key = jax.random.PRNGKey(0)
    k_par, k_ev, k_ch = jax.random.split(key, 3)

    params = make_params(
        k_par,
        event_emsize=event_emsize, chord_emsize=chord_emsize,
        events_size=events_size, chords_size=chords_size,
        hidden_size=hidden_size, n_layers=n_layers, batch_size=batch_size)

    input_event = jax.random.randint(
        k_ev, (seq_len, batch_size), 0, events_size, dtype=jnp.int32)
    input_chord = jax.random.randint(
        k_ch, (seq_len, batch_size), 0, chords_size, dtype=jnp.int32)

    y = lstm_model_forward(
        input_event, input_chord, params,
        n_layers=n_layers, seq_len=seq_len,
        hidden_size=hidden_size, events_size=events_size)
    y = jax.block_until_ready(y)

    y_ref = reference_forward(
        input_event, input_chord, params,
        n_layers=n_layers, seq_len=seq_len, hidden_size=hidden_size)

    assert y.shape == (seq_len, batch_size, events_size)
    # bf16 MXU operands + bf16 gx/hbuf buffers => relaxed tolerance vs f32 ref.
    assert jnp.allclose(y, y_ref, rtol=5e-2, atol=5e-3), "mismatch vs reference"
    print("KERNEL_OK")
</pallas_src>

<mosaic_0001>
module attributes {stable_mosaic.version = 11 : i64} {
  func.func @lstm_recurrence_kernel(%arg0: memref<8x8x32xbf16, #tpu.memory_space<vmem>>, %arg1: memref<2x8x32xf32, #tpu.memory_space<vmem>>, %arg2: memref<2x8x32xf32, #tpu.memory_space<vmem>>, %arg3: memref<2x32x128xbf16, #tpu.memory_space<vmem>>, %arg4: memref<2x32x128xbf16, #tpu.memory_space<vmem>>, %arg5: memref<2x1x128xf32, #tpu.memory_space<vmem>>, %arg6: memref<8x8x32xbf16, #tpu.memory_space<vmem>>, %arg7: memref<8x8x128xbf16, #tpu.memory_space<vmem>>) attributes {dimension_semantics = [], scalar_prefetch = 0 : i64, scratch_operands = 1 : i64, tpu.core_type = #tpu.core_type<tc>} {
    %0 = tpu.iota {dimensions = array<i32: 1>} : vector<8x128xi32>
    %c64_i32 = arith.constant 64 : i32
    %1 = vector.broadcast %c64_i32 : i32 to vector<8x128xi32>
    %2 = arith.cmpi sge, %0, %1 : vector<8x128xi32>
    %c96_i32 = arith.constant 96 : i32
    %3 = vector.broadcast %c96_i32 : i32 to vector<8x128xi32>
    %4 = arith.cmpi slt, %0, %3 : vector<8x128xi32>
    %5 = arith.andi %2, %4 : vector<8x128xi1>
    %cst = arith.constant 1.000000e+00 : f32
    %cst_0 = arith.constant 5.000000e-01 : f32
    %6 = vector.broadcast %cst : f32 to vector<8x128xf32>
    %7 = vector.broadcast %cst_0 : f32 to vector<8x128xf32>
    %8 = arith.select %5, %6, %7 : vector<8x128xi1>, vector<8x128xf32>
    %c0 = arith.constant 0 : index
    %c0_1 = arith.constant 0 : index
    %c0_2 = arith.constant 0 : index
    %9 = vector.load %arg3[%c0, %c0_1, %c0_2] : memref<2x32x128xbf16, #tpu.memory_space<vmem>>, vector<1x32x128xbf16>
    %10 = vector.shape_cast %9 : vector<1x32x128xbf16> to vector<32x128xbf16>
    %c0_3 = arith.constant 0 : index
    %c0_4 = arith.constant 0 : index
    %c0_5 = arith.constant 0 : index
    %11 = vector.load %arg4[%c0_3, %c0_4, %c0_5] : memref<2x32x128xbf16, #tpu.memory_space<vmem>>, vector<1x32x128xbf16>
    %12 = vector.shape_cast %11 : vector<1x32x128xbf16> to vector<32x128xbf16>
    %c0_6 = arith.constant 0 : index
    %c0_7 = arith.constant 0 : index
    %c0_8 = arith.constant 0 : index
    %13 = vector.load %arg5[%c0_6, %c0_7, %c0_8] : memref<2x1x128xf32, #tpu.memory_space<vmem>>, vector<1x1x128xf32>
    %14 = vector.shape_cast %13 : vector<1x1x128xf32> to vector<1x128xf32>
    %c0_9 = arith.constant 0 : index
    %c0_10 = arith.constant 0 : index
    %c0_11 = arith.constant 0 : index
    %15 = vector.load %arg0[%c0_9, %c0_10, %c0_11] : memref<8x8x32xbf16, #tpu.memory_space<vmem>>, vector<8x8x32xbf16>
    %16 = vector.shape_cast %15 : vector<8x8x32xbf16> to vector<64x32xbf16>
    %cst_12 = arith.constant dense<0.000000e+00> : vector<64x128xf32>
    %17 = tpu.matmul %16, %10, %cst_12 {dimension_numbers = #tpu.dot_dimension_numbers<[1], [0], [0], [1], [0, 0, 1, 1], [], []>} : vector<64x32xbf16>, vector<32x128xbf16>, vector<64x128xf32> -> vector<64x128xf32>
    %18 = vector.broadcast %14 : vector<1x128xf32> to vector<64x128xf32>
    %19 = arith.addf %17, %18 : vector<64x128xf32>
    %20 = vector.shape_cast %19 : vector<64x128xf32> to vector<8x8x128xf32>
    %21 = arith.truncf %20 : vector<8x8x128xf32> to vector<8x8x128xbf16>
    %c0_13 = arith.constant 0 : index
    %c0_14 = arith.constant 0 : index
    %c0_15 = arith.constant 0 : index
    %22 = vector.load %arg7[%c0_13, %c0_14, %c0_15] : memref<8x8x128xbf16, #tpu.memory_space<vmem>>, vector<8x8x128xbf16>
    tpu.vector_store %arg7[%c0_13, %c0_14, %c0_15], %21 {strides = array<i32>} : memref<8x8x128xbf16, #tpu.memory_space<vmem>>, vector<8x8x128xbf16>,
    %c0_16 = arith.constant 0 : index
    %c0_17 = arith.constant 0 : index
    %c0_18 = arith.constant 0 : index
    %23 = vector.load %arg1[%c0_16, %c0_17, %c0_18] : memref<2x8x32xf32, #tpu.memory_space<vmem>>, vector<1x8x32xf32>
    %24 = vector.shape_cast %23 : vector<1x8x32xf32> to vector<8x32xf32>
    %c0_19 = arith.constant 0 : index
    %c0_20 = arith.constant 0 : index
    %c0_21 = arith.constant 0 : index
    %25 = vector.load %arg2[%c0_19, %c0_20, %c0_21] : memref<2x8x32xf32, #tpu.memory_space<vmem>>, vector<1x8x32xf32>
    %26 = vector.shape_cast %25 : vector<1x8x32xf32> to vector<8x32xf32>
    %c0_i32 = arith.constant 0 : i32
    %27 = arith.index_cast %c0_i32 : i32 to index
    %c0_22 = arith.constant 0 : index
    %c0_23 = arith.constant 0 : index
    %28 = vector.load %arg7[%27, %c0_22, %c0_23] : memref<8x8x128xbf16, #tpu.memory_space<vmem>>, vector<1x8x128xbf16>
    %29 = vector.shape_cast %28 : vector<1x8x128xbf16> to vector<8x128xbf16>
    %30 = arith.truncf %24 : vector<8x32xf32> to vector<8x32xbf16>
    %cst_24 = arith.constant dense<0.000000e+00> : vector<8x128xf32>
    %31 = tpu.matmul %30, %12, %cst_24 {dimension_numbers = #tpu.dot_dimension_numbers<[1], [0], [0], [1], [0, 0, 1, 1], [], []>} : vector<8x32xbf16>, vector<32x128xbf16>, vector<8x128xf32> -> vector<8x128xf32>
    %32 = arith.extf %29 : vector<8x128xbf16> to vector<8x128xf32>
    %33 = arith.addf %32, %31 : vector<8x128xf32>
    %34 = arith.mulf %33, %8 : vector<8x128xf32>
    %35 = math.tanh %34 : vector<8x128xf32>
    %cst_25 = arith.constant 1.000000e+00 : f32
    %36 = vector.broadcast %cst_25 : f32 to vector<8x128xf32>
    %37 = arith.addf %36, %35 : vector<8x128xf32>
    %cst_26 = arith.constant 5.000000e-01 : f32
    %38 = vector.broadcast %cst_26 : f32 to vector<8x128xf32>
    %39 = arith.mulf %38, %37 : vector<8x128xf32>
    %40 = arith.select %5, %35, %39 : vector<8x128xi1>, vector<8x128xf32>
    %41 = vector.extract_strided_slice %40 {offsets = [0, 0], sizes = [8, 32], strides = [1, 1]} : vector<8x128xf32> to vector<8x32xf32>
    %42 = vector.extract_strided_slice %40 {offsets = [0, 32], sizes = [8, 32], strides = [1, 1]} : vector<8x128xf32> to vector<8x32xf32>
    %43 = vector.extract_strided_slice %40 {offsets = [0, 64], sizes = [8, 32], strides = [1, 1]} : vector<8x128xf32> to vector<8x32xf32>
    %44 = vector.extract_strided_slice %40 {offsets = [0, 96], sizes = [8, 32], strides = [1, 1]} : vector<8x128xf32> to vector<8x32xf32>
    %45 = arith.mulf %42, %26 : vector<8x32xf32>
    %46 = arith.mulf %41, %43 : vector<8x32xf32>
    %47 = arith.addf %45, %46 : vector<8x32xf32>
    %48 = math.tanh %47 : vector<8x32xf32>
    %49 = arith.mulf %44, %48 : vector<8x32xf32>
    %50 = arith.truncf %49 : vector<8x32xf32> to vector<8x32xbf16>
    %51 = arith.index_cast %c0_i32 : i32 to index
    %c0_27 = arith.constant 0 : index
    %c0_28 = arith.constant 0 : index
    %52 = vector.load %arg6[%51, %c0_27, %c0_28] : memref<8x8x32xbf16, #tpu.memory_space<vmem>>, vector<1x8x32xbf16>
    %53 = vector.shape_cast %52 : vector<1x8x32xbf16> to vector<8x32xbf16>
    %54 = vector.shape_cast %50 : vector<8x32xbf16> to vector<1x8x32xbf16>
    tpu.vector_store %arg6[%51, %c0_27, %c0_28], %54 {strides = array<i32>} : memref<8x8x32xbf16, #tpu.memory_space<vmem>>, vector<1x8x32xbf16>,
    %c1_i32 = arith.constant 1 : i32
    %55 = arith.index_cast %c1_i32 : i32 to index
    %c0_29 = arith.constant 0 : index
    %c0_30 = arith.constant 0 : index
    %56 = vector.load %arg7[%55, %c0_29, %c0_30] : memref<8x8x128xbf16, #tpu.memory_space<vmem>>, vector<1x8x128xbf16>
    %57 = vector.shape_cast %56 : vector<1x8x128xbf16> to vector<8x128xbf16>
    %58 = arith.truncf %49 : vector<8x32xf32> to vector<8x32xbf16>
    %cst_31 = arith.constant dense<0.000000e+00> : vector<8x128xf32>
    %59 = tpu.matmul %58, %12, %cst_31 {dimension_numbers = #tpu.dot_dimension_numbers<[1], [0], [0], [1], [0, 0, 1, 1], [], []>} : vector<8x32xbf16>, vector<32x128xbf16>, vector<8x128xf32> -> vector<8x128xf32>
    %60 = arith.extf %57 : vector<8x128xbf16> to vector<8x128xf32>
    %61 = arith.addf %60, %59 : vector<8x128xf32>
    %62 = arith.mulf %61, %8 : vector<8x128xf32>
    %63 = math.tanh %62 : vector<8x128xf32>
    %cst_32 = arith.constant 1.000000e+00 : f32
    %64 = vector.broadcast %cst_32 : f32 to vector<8x128xf32>
    %65 = arith.addf %64, %63 : vector<8x128xf32>
    %cst_33 = arith.constant 5.000000e-01 : f32
    %66 = vector.broadcast %cst_33 : f32 to vector<8x128xf32>
    %67 = arith.mulf %66, %65 : vector<8x128xf32>
    %68 = arith.select %5, %63, %67 : vector<8x128xi1>, vector<8x128xf32>
    %69 = vector.extract_strided_slice %68 {offsets = [0, 0], sizes = [8, 32], strides = [1, 1]} : vector<8x128xf32> to vector<8x32xf32>
    %70 = vector.extract_strided_slice %68 {offsets = [0, 32], sizes = [8, 32], strides = [1, 1]} : vector<8x128xf32> to vector<8x32xf32>
    %71 = vector.extract_strided_slice %68 {offsets = [0, 64], sizes = [8, 32], strides = [1, 1]} : vector<8x128xf32> to vector<8x32xf32>
    %72 = vector.extract_strided_slice %68 {offsets = [0, 96], sizes = [8, 32], strides = [1, 1]} : vector<8x128xf32> to vector<8x32xf32>
    %73 = arith.mulf %70, %47 : vector<8x32xf32>
    %74 = arith.mulf %69, %71 : vector<8x32xf32>
    %75 = arith.addf %73, %74 : vector<8x32xf32>
    %76 = math.tanh %75 : vector<8x32xf32>
    %77 = arith.mulf %72, %76 : vector<8x32xf32>
    %78 = arith.truncf %77 : vector<8x32xf32> to vector<8x32xbf16>
    %79 = arith.index_cast %c1_i32 : i32 to index
    %c0_34 = arith.constant 0 : index
    %c0_35 = arith.constant 0 : index
    %80 = vector.load %arg6[%79, %c0_34, %c0_35] : memref<8x8x32xbf16, #tpu.memory_space<vmem>>, vector<1x8x32xbf16>
    %81 = vector.shape_cast %80 : vector<1x8x32xbf16> to vector<8x32xbf16>
    %82 = vector.shape_cast %78 : vector<8x32xbf16> to vector<1x8x32xbf16>
    tpu.vector_store %arg6[%79, %c0_34, %c0_35], %82 {strides = array<i32>} : memref<8x8x32xbf16, #tpu.memory_space<vmem>>, vector<1x8x32xbf16>,
    %c2_i32 = arith.constant 2 : i32
    %83 = arith.index_cast %c2_i32 : i32 to index
    %c0_36 = arith.constant 0 : index
    %c0_37 = arith.constant 0 : index
    %84 = vector.load %arg7[%83, %c0_36, %c0_37] : memref<8x8x128xbf16, #tpu.memory_space<vmem>>, vector<1x8x128xbf16>
    %85 = vector.shape_cast %84 : vector<1x8x128xbf16> to vector<8x128xbf16>
    %86 = arith.truncf %77 : vector<8x32xf32> to vector<8x32xbf16>
    %cst_38 = arith.constant dense<0.000000e+00> : vector<8x128xf32>
    %87 = tpu.matmul %86, %12, %cst_38 {dimension_numbers = #tpu.dot_dimension_numbers<[1], [0], [0], [1], [0, 0, 1, 1], [], []>} : vector<8x32xbf16>, vector<32x128xbf16>, vector<8x128xf32> -> vector<8x128xf32>
    %88 = arith.extf %85 : vector<8x128xbf16> to vector<8x128xf32>
    %89 = arith.addf %88, %87 : vector<8x128xf32>
    %90 = arith.mulf %89, %8 : vector<8x128xf32>
    %91 = math.tanh %90 : vector<8x128xf32>
    %cst_39 = arith.constant 1.000000e+00 : f32
    %92 = vector.broadcast %cst_39 : f32 to vector<8x128xf32>
    %93 = arith.addf %92, %91 : vector<8x128xf32>
    %cst_40 = arith.constant 5.000000e-01 : f32
    %94 = vector.broadcast %cst_40 : f32 to vector<8x128xf32>
    %95 = arith.mulf %94, %93 : vector<8x128xf32>
    %96 = arith.select %5, %91, %95 : vector<8x128xi1>, vector<8x128xf32>
    %97 = vector.extract_strided_slice %96 {offsets = [0, 0], sizes = [8, 32], strides = [1, 1]} : vector<8x128xf32> to vector<8x32xf32>
    %98 = vector.extract_strided_slice %96 {offsets = [0, 32], sizes = [8, 32], strides = [1, 1]} : vector<8x128xf32> to vector<8x32xf32>
    %99 = vector.extract_strided_slice %96 {offsets = [0, 64], sizes = [8, 32], strides = [1, 1]} : vector<8x128xf32> to vector<8x32xf32>
    %100 = vector.extract_strided_slice %96 {offsets = [0, 96], sizes = [8, 32], strides = [1, 1]} : vector<8x128xf32> to vector<8x32xf32>
    %101 = arith.mulf %98, %75 : vector<8x32xf32>
    %102 = arith.mulf %97, %99 : vector<8x32xf32>
    %103 = arith.addf %101, %102 : vector<8x32xf32>
    %104 = math.tanh %103 : vector<8x32xf32>
    %105 = arith.mulf %100, %104 : vector<8x32xf32>
    %106 = arith.truncf %105 : vector<8x32xf32> to vector<8x32xbf16>
    %107 = arith.index_cast %c2_i32 : i32 to index
    %c0_41 = arith.constant 0 : index
    %c0_42 = arith.constant 0 : index
    %108 = vector.load %arg6[%107, %c0_41, %c0_42] : memref<8x8x32xbf16, #tpu.memory_space<vmem>>, vector<1x8x32xbf16>
    %109 = vector.shape_cast %108 : vector<1x8x32xbf16> to vector<8x32xbf16>
    %110 = vector.shape_cast %106 : vector<8x32xbf16> to vector<1x8x32xbf16>
    tpu.vector_store %arg6[%107, %c0_41, %c0_42], %110 {strides = array<i32>} : memref<8x8x32xbf16, #tpu.memory_space<vmem>>, vector<1x8x32xbf16>,
    %c3_i32 = arith.constant 3 : i32
    %111 = arith.index_cast %c3_i32 : i32 to index
    %c0_43 = arith.constant 0 : index
    %c0_44 = arith.constant 0 : index
    %112 = vector.load %arg7[%111, %c0_43, %c0_44] : memref<8x8x128xbf16, #tpu.memory_space<vmem>>, vector<1x8x128xbf16>
    %113 = vector.shape_cast %112 : vector<1x8x128xbf16> to vector<8x128xbf16>
    %114 = arith.truncf %105 : vector<8x32xf32> to vector<8x32xbf16>
    %cst_45 = arith.constant dense<0.000000e+00> : vector<8x128xf32>
    %115 = tpu.matmul %114, %12, %cst_45 {dimension_numbers = #tpu.dot_dimension_numbers<[1], [0], [0], [1], [0, 0, 1, 1], [], []>} : vector<8x32xbf16>, vector<32x128xbf16>, vector<8x128xf32> -> vector<8x128xf32>
    %116 = arith.extf %113 : vector<8x128xbf16> to vector<8x128xf32>
    %117 = arith.addf %116, %115 : vector<8x128xf32>
    %118 = arith.mulf %117, %8 : vector<8x128xf32>
    %119 = math.tanh %118 : vector<8x128xf32>
    %cst_46 = arith.constant 1.000000e+00 : f32
    %120 = vector.broadcast %cst_46 : f32 to vector<8x128xf32>
    %121 = arith.addf %120, %119 : vector<8x128xf32>
    %cst_47 = arith.constant 5.000000e-01 : f32
    %122 = vector.broadcast %cst_47 : f32 to vector<8x128xf32>
    %123 = arith.mulf %122, %121 : vector<8x128xf32>
    %124 = arith.select %5, %119, %123 : vector<8x128xi1>, vector<8x128xf32>
    %125 = vector.extract_strided_slice %124 {offsets = [0, 0], sizes = [8, 32], strides = [1, 1]} : vector<8x128xf32> to vector<8x32xf32>
    %126 = vector.extract_strided_slice %124 {offsets = [0, 32], sizes = [8, 32], strides = [1, 1]} : vector<8x128xf32> to vector<8x32xf32>
    %127 = vector.extract_strided_slice %124 {offsets = [0, 64], sizes = [8, 32], strides = [1, 1]} : vector<8x128xf32> to vector<8x32xf32>
    %128 = vector.extract_strided_slice %124 {offsets = [0, 96], sizes = [8, 32], strides = [1, 1]} : vector<8x128xf32> to vector<8x32xf32>
    %129 = arith.mulf %126, %103 : vector<8x32xf32>
    %130 = arith.mulf %125, %127 : vector<8x32xf32>
    %131 = arith.addf %129, %130 : vector<8x32xf32>
    %132 = math.tanh %131 : vector<8x32xf32>
    %133 = arith.mulf %128, %132 : vector<8x32xf32>
    %134 = arith.truncf %133 : vector<8x32xf32> to vector<8x32xbf16>
    %135 = arith.index_cast %c3_i32 : i32 to index
    %c0_48 = arith.constant 0 : index
    %c0_49 = arith.constant 0 : index
    %136 = vector.load %arg6[%135, %c0_48, %c0_49] : memref<8x8x32xbf16, #tpu.memory_space<vmem>>, vector<1x8x32xbf16>
    %137 = vector.shape_cast %136 : vector<1x8x32xbf16> to vector<8x32xbf16>
    %138 = vector.shape_cast %134 : vector<8x32xbf16> to vector<1x8x32xbf16>
    tpu.vector_store %arg6[%135, %c0_48, %c0_49], %138 {strides = array<i32>} : memref<8x8x32xbf16, #tpu.memory_space<vmem>>, vector<1x8x32xbf16>,
    %c4_i32 = arith.constant 4 : i32
    %139 = arith.index_cast %c4_i32 : i32 to index
    %c0_50 = arith.constant 0 : index
    %c0_51 = arith.constant 0 : index
    %140 = vector.load %arg7[%139, %c0_50, %c0_51] : memref<8x8x128xbf16, #tpu.memory_space<vmem>>, vector<1x8x128xbf16>
    %141 = vector.shape_cast %140 : vector<1x8x128xbf16> to vector<8x128xbf16>
    %142 = arith.truncf %133 : vector<8x32xf32> to vector<8x32xbf16>
    %cst_52 = arith.constant dense<0.000000e+00> : vector<8x128xf32>
    %143 = tpu.matmul %142, %12, %cst_52 {dimension_numbers = #tpu.dot_dimension_numbers<[1], [0], [0], [1], [0, 0, 1, 1], [], []>} : vector<8x32xbf16>, vector<32x128xbf16>, vector<8x128xf32> -> vector<8x128xf32>
    %144 = arith.extf %141 : vector<8x128xbf16> to vector<8x128xf32>
    %145 = arith.addf %144, %143 : vector<8x128xf32>
    %146 = arith.mulf %145, %8 : vector<8x128xf32>
    %147 = math.tanh %146 : vector<8x128xf32>
    %cst_53 = arith.constant 1.000000e+00 : f32
    %148 = vector.broadcast %cst_53 : f32 to vector<8x128xf32>
    %149 = arith.addf %148, %147 : vector<8x128xf32>
    %cst_54 = arith.constant 5.000000e-01 : f32
    %150 = vector.broadcast %cst_54 : f32 to vector<8x128xf32>
    %151 = arith.mulf %150, %149 : vector<8x128xf32>
    %152 = arith.select %5, %147, %151 : vector<8x128xi1>, vector<8x128xf32>
    %153 = vector.extract_strided_slice %152 {offsets = [0, 0], sizes = [8, 32], strides = [1, 1]} : vector<8x128xf32> to vector<8x32xf32>
    %154 = vector.extract_strided_slice %152 {offsets = [0, 32], sizes = [8, 32], strides = [1, 1]} : vector<8x128xf32> to vector<8x32xf32>
    %155 = vector.extract_strided_slice %152 {offsets = [0, 64], sizes = [8, 32], strides = [1, 1]} : vector<8x128xf32> to vector<8x32xf32>
    %156 = vector.extract_strided_slice %152 {offsets = [0, 96], sizes = [8, 32], strides = [1, 1]} : vector<8x128xf32> to vector<8x32xf32>
    %157 = arith.mulf %154, %131 : vector<8x32xf32>
    %158 = arith.mulf %153, %155 : vector<8x32xf32>
    %159 = arith.addf %157, %158 : vector<8x32xf32>
    %160 = math.tanh %159 : vector<8x32xf32>
    %161 = arith.mulf %156, %160 : vector<8x32xf32>
    %162 = arith.truncf %161 : vector<8x32xf32> to vector<8x32xbf16>
    %163 = arith.index_cast %c4_i32 : i32 to index
    %c0_55 = arith.constant 0 : index
    %c0_56 = arith.constant 0 : index
    %164 = vector.load %arg6[%163, %c0_55, %c0_56] : memref<8x8x32xbf16, #tpu.memory_space<vmem>>, vector<1x8x32xbf16>
    %165 = vector.shape_cast %164 : vector<1x8x32xbf16> to vector<8x32xbf16>
    %166 = vector.shape_cast %162 : vector<8x32xbf16> to vector<1x8x32xbf16>
    tpu.vector_store %arg6[%163, %c0_55, %c0_56], %166 {strides = array<i32>} : memref<8x8x32xbf16, #tpu.memory_space<vmem>>, vector<1x8x32xbf16>,
    %c5_i32 = arith.constant 5 : i32
    %167 = arith.index_cast %c5_i32 : i32 to index
    %c0_57 = arith.constant 0 : index
    %c0_58 = arith.constant 0 : index
    %168 = vector.load %arg7[%167, %c0_57, %c0_58] : memref<8x8x128xbf16, #tpu.memory_space<vmem>>, vector<1x8x128xbf16>
    %169 = vector.shape_cast %168 : vector<1x8x128xbf16> to vector<8x128xbf16>
    %170 = arith.truncf %161 : vector<8x32xf32> to vector<8x32xbf16>
    %cst_59 = arith.constant dense<0.000000e+00> : vector<8x128xf32>
    %171 = tpu.matmul %170, %12, %cst_59 {dimension_numbers = #tpu.dot_dimension_numbers<[1], [0], [0], [1], [0, 0, 1, 1], [], []>} : vector<8x32xbf16>, vector<32x128xbf16>, vector<8x128xf32> -> vector<8x128xf32>
    %172 = arith.extf %169 : vector<8x128xbf16> to vector<8x128xf32>
    %173 = arith.addf %172, %171 : vector<8x128xf32>
    %174 = arith.mulf %173, %8 : vector<8x128xf32>
    %175 = math.tanh %174 : vector<8x128xf32>
    %cst_60 = arith.constant 1.000000e+00 : f32
    %176 = vector.broadcast %cst_60 : f32 to vector<8x128xf32>
    %177 = arith.addf %176, %175 : vector<8x128xf32>
    %cst_61 = arith.constant 5.000000e-01 : f32
    %178 = vector.broadcast %cst_61 : f32 to vector<8x128xf32>
    %179 = arith.mulf %178, %177 : vector<8x128xf32>
    %180 = arith.select %5, %175, %179 : vector<8x128xi1>, vector<8x128xf32>
    %181 = vector.extract_strided_slice %180 {offsets = [0, 0], sizes = [8, 32], strides = [1, 1]} : vector<8x128xf32> to vector<8x32xf32>
    %182 = vector.extract_strided_slice %180 {offsets = [0, 32], sizes = [8, 32], strides = [1, 1]} : vector<8x128xf32> to vector<8x32xf32>
    %183 = vector.extract_strided_slice %180 {offsets = [0, 64], sizes = [8, 32], strides = [1, 1]} : vector<8x128xf32> to vector<8x32xf32>
    %184 = vector.extract_strided_slice %180 {offsets = [0, 96], sizes = [8, 32], strides = [1, 1]} : vector<8x128xf32> to vector<8x32xf32>
    %185 = arith.mulf %182, %159 : vector<8x32xf32>
    %186 = arith.mulf %181, %183 : vector<8x32xf32>
    %187 = arith.addf %185, %186 : vector<8x32xf32>
    %188 = math.tanh %187 : vector<8x32xf32>
    %189 = arith.mulf %184, %188 : vector<8x32xf32>
    %190 = arith.truncf %189 : vector<8x32xf32> to vector<8x32xbf16>
    %191 = arith.index_cast %c5_i32 : i32 to index
    %c0_62 = arith.constant 0 : index
    %c0_63 = arith.constant 0 : index
    %192 = vector.load %arg6[%191, %c0_62, %c0_63] : memref<8x8x32xbf16, #tpu.memory_space<vmem>>, vector<1x8x32xbf16>
    %193 = vector.shape_cast %192 : vector<1x8x32xbf16> to vector<8x32xbf16>
    %194 = vector.shape_cast %190 : vector<8x32xbf16> to vector<1x8x32xbf16>
    tpu.vector_store %arg6[%191, %c0_62, %c0_63], %194 {strides = array<i32>} : memref<8x8x32xbf16, #tpu.memory_space<vmem>>, vector<1x8x32xbf16>,
    %c6_i32 = arith.constant 6 : i32
    %195 = arith.index_cast %c6_i32 : i32 to index
    %c0_64 = arith.constant 0 : index
    %c0_65 = arith.constant 0 : index
    %196 = vector.load %arg7[%195, %c0_64, %c0_65] : memref<8x8x128xbf16, #tpu.memory_space<vmem>>, vector<1x8x128xbf16>
    %197 = vector.shape_cast %196 : vector<1x8x128xbf16> to vector<8x128xbf16>
    %198 = arith.truncf %189 : vector<8x32xf32> to vector<8x32xbf16>
    %cst_66 = arith.constant dense<0.000000e+00> : vector<8x128xf32>
    %199 = tpu.matmul %198, %12, %cst_66 {dimension_numbers = #tpu.dot_dimension_numbers<[1], [0], [0], [1], [0, 0, 1, 1], [], []>} : vector<8x32xbf16>, vector<32x128xbf16>, vector<8x128xf32> -> vector<8x128xf32>
    %200 = arith.extf %197 : vector<8x128xbf16> to vector<8x128xf32>
    %201 = arith.addf %200, %199 : vector<8x128xf32>
    %202 = arith.mulf %201, %8 : vector<8x128xf32>
    %203 = math.tanh %202 : vector<8x128xf32>
    %cst_67 = arith.constant 1.000000e+00 : f32
    %204 = vector.broadcast %cst_67 : f32 to vector<8x128xf32>
    %205 = arith.addf %204, %203 : vector<8x128xf32>
    %cst_68 = arith.constant 5.000000e-01 : f32
    %206 = vector.broadcast %cst_68 : f32 to vector<8x128xf32>
    %207 = arith.mulf %206, %205 : vector<8x128xf32>
    %208 = arith.select %5, %203, %207 : vector<8x128xi1>, vector<8x128xf32>
    %209 = vector.extract_strided_slice %208 {offsets = [0, 0], sizes = [8, 32], strides = [1, 1]} : vector<8x128xf32> to vector<8x32xf32>
    %210 = vector.extract_strided_slice %208 {offsets = [0, 32], sizes = [8, 32], strides = [1, 1]} : vector<8x128xf32> to vector<8x32xf32>
    %211 = vector.extract_strided_slice %208 {offsets = [0, 64], sizes = [8, 32], strides = [1, 1]} : vector<8x128xf32> to vector<8x32xf32>
    %212 = vector.extract_strided_slice %208 {offsets = [0, 96], sizes = [8, 32], strides = [1, 1]} : vector<8x128xf32> to vector<8x32xf32>
    %213 = arith.mulf %210, %187 : vector<8x32xf32>
    %214 = arith.mulf %209, %211 : vector<8x32xf32>
    %215 = arith.addf %213, %214 : vector<8x32xf32>
    %216 = math.tanh %215 : vector<8x32xf32>
    %217 = arith.mulf %212, %216 : vector<8x32xf32>
    %218 = arith.truncf %217 : vector<8x32xf32> to vector<8x32xbf16>
    %219 = arith.index_cast %c6_i32 : i32 to index
    %c0_69 = arith.constant 0 : index
    %c0_70 = arith.constant 0 : index
    %220 = vector.load %arg6[%219, %c0_69, %c0_70] : memref<8x8x32xbf16, #tpu.memory_space<vmem>>, vector<1x8x32xbf16>
    %221 = vector.shape_cast %220 : vector<1x8x32xbf16> to vector<8x32xbf16>
    %222 = vector.shape_cast %218 : vector<8x32xbf16> to vector<1x8x32xbf16>
    tpu.vector_store %arg6[%219, %c0_69, %c0_70], %222 {strides = array<i32>} : memref<8x8x32xbf16, #tpu.memory_space<vmem>>, vector<1x8x32xbf16>,
    %c7_i32 = arith.constant 7 : i32
    %223 = arith.index_cast %c7_i32 : i32 to index
    %c0_71 = arith.constant 0 : index
    %c0_72 = arith.constant 0 : index
    %224 = vector.load %arg7[%223, %c0_71, %c0_72] : memref<8x8x128xbf16, #tpu.memory_space<vmem>>, vector<1x8x128xbf16>
    %225 = vector.shape_cast %224 : vector<1x8x128xbf16> to vector<8x128xbf16>
    %226 = arith.truncf %217 : vector<8x32xf32> to vector<8x32xbf16>
    %cst_73 = arith.constant dense<0.000000e+00> : vector<8x128xf32>
    %227 = tpu.matmul %226, %12, %cst_73 {dimension_numbers = #tpu.dot_dimension_numbers<[1], [0], [0], [1], [0, 0, 1, 1], [], []>} : vector<8x32xbf16>, vector<32x128xbf16>, vector<8x128xf32> -> vector<8x128xf32>
    %228 = arith.extf %225 : vector<8x128xbf16> to vector<8x128xf32>
    %229 = arith.addf %228, %227 : vector<8x128xf32>
    %230 = arith.mulf %229, %8 : vector<8x128xf32>
    %231 = math.tanh %230 : vector<8x128xf32>
    %cst_74 = arith.constant 1.000000e+00 : f32
    %232 = vector.broadcast %cst_74 : f32 to vector<8x128xf32>
    %233 = arith.addf %232, %231 : vector<8x128xf32>
    %cst_75 = arith.constant 5.000000e-01 : f32
    %234 = vector.broadcast %cst_75 : f32 to vector<8x128xf32>
    %235 = arith.mulf %234, %233 : vector<8x128xf32>
    %236 = arith.select %5, %231, %235 : vector<8x128xi1>, vector<8x128xf32>
    %237 = vector.extract_strided_slice %236 {offsets = [0, 0], sizes = [8, 32], strides = [1, 1]} : vector<8x128xf32> to vector<8x32xf32>
    %238 = vector.extract_strided_slice %236 {offsets = [0, 32], sizes = [8, 32], strides = [1, 1]} : vector<8x128xf32> to vector<8x32xf32>
    %239 = vector.extract_strided_slice %236 {offsets = [0, 64], sizes = [8, 32], strides = [1, 1]} : vector<8x128xf32> to vector<8x32xf32>
    %240 = vector.extract_strided_slice %236 {offsets = [0, 96], sizes = [8, 32], strides = [1, 1]} : vector<8x128xf32> to vector<8x32xf32>
    %241 = arith.mulf %238, %215 : vector<8x32xf32>
    %242 = arith.mulf %237, %239 : vector<8x32xf32>
    %243 = arith.addf %241, %242 : vector<8x32xf32>
    %244 = math.tanh %243 : vector<8x32xf32>
    %245 = arith.mulf %240, %244 : vector<8x32xf32>
    %246 = arith.truncf %245 : vector<8x32xf32> to vector<8x32xbf16>
    %247 = arith.index_cast %c7_i32 : i32 to index
    %c0_76 = arith.constant 0 : index
    %c0_77 = arith.constant 0 : index
    %248 = vector.load %arg6[%247, %c0_76, %c0_77] : memref<8x8x32xbf16, #tpu.memory_space<vmem>>, vector<1x8x32xbf16>
    %249 = vector.shape_cast %248 : vector<1x8x32xbf16> to vector<8x32xbf16>
    %250 = vector.shape_cast %246 : vector<8x32xbf16> to vector<1x8x32xbf16>
    tpu.vector_store %arg6[%247, %c0_76, %c0_77], %250 {strides = array<i32>} : memref<8x8x32xbf16, #tpu.memory_space<vmem>>, vector<1x8x32xbf16>,
    %c8_i32 = arith.constant 8 : i32
    %c1 = arith.constant 1 : index
    %c0_78 = arith.constant 0 : index
    %c0_79 = arith.constant 0 : index
    %251 = vector.load %arg3[%c1, %c0_78, %c0_79] : memref<2x32x128xbf16, #tpu.memory_space<vmem>>, vector<1x32x128xbf16>
    %252 = vector.shape_cast %251 : vector<1x32x128xbf16> to vector<32x128xbf16>
    %c1_80 = arith.constant 1 : index
    %c0_81 = arith.constant 0 : index
    %c0_82 = arith.constant 0 : index
    %253 = vector.load %arg4[%c1_80, %c0_81, %c0_82] : memref<2x32x128xbf16, #tpu.memory_space<vmem>>, vector<1x32x128xbf16>
    %254 = vector.shape_cast %253 : vector<1x32x128xbf16> to vector<32x128xbf16>
    %c1_83 = arith.constant 1 : index
    %c0_84 = arith.constant 0 : index
    %c0_85 = arith.constant 0 : index
    %255 = vector.load %arg5[%c1_83, %c0_84, %c0_85] : memref<2x1x128xf32, #tpu.memory_space<vmem>>, vector<1x1x128xf32>
    %256 = vector.shape_cast %255 : vector<1x1x128xf32> to vector<1x128xf32>
    %c0_86 = arith.constant 0 : index
    %c0_87 = arith.constant 0 : index
    %c0_88 = arith.constant 0 : index
    %257 = vector.load %arg6[%c0_86, %c0_87, %c0_88] : memref<8x8x32xbf16, #tpu.memory_space<vmem>>, vector<8x8x32xbf16>
    %258 = vector.shape_cast %257 : vector<8x8x32xbf16> to vector<64x32xbf16>
    %cst_89 = arith.constant dense<0.000000e+00> : vector<64x128xf32>
    %259 = tpu.matmul %258, %252, %cst_89 {dimension_numbers = #tpu.dot_dimension_numbers<[1], [0], [0], [1], [0, 0, 1, 1], [], []>} : vector<64x32xbf16>, vector<32x128xbf16>, vector<64x128xf32> -> vector<64x128xf32>
    %260 = vector.broadcast %256 : vector<1x128xf32> to vector<64x128xf32>
    %261 = arith.addf %259, %260 : vector<64x128xf32>
    %262 = vector.shape_cast %261 : vector<64x128xf32> to vector<8x8x128xf32>
    %263 = arith.truncf %262 : vector<8x8x128xf32> to vector<8x8x128xbf16>
    %c0_90 = arith.constant 0 : index
    %c0_91 = arith.constant 0 : index
    %c0_92 = arith.constant 0 : index
    %264 = vector.load %arg7[%c0_90, %c0_91, %c0_92] : memref<8x8x128xbf16, #tpu.memory_space<vmem>>, vector<8x8x128xbf16>
    tpu.vector_store %arg7[%c0_90, %c0_91, %c0_92], %263 {strides = array<i32>} : memref<8x8x128xbf16, #tpu.memory_space<vmem>>, vector<8x8x128xbf16>,
    %c1_93 = arith.constant 1 : index
    %c0_94 = arith.constant 0 : index
    %c0_95 = arith.constant 0 : index
    %265 = vector.load %arg1[%c1_93, %c0_94, %c0_95] : memref<2x8x32xf32, #tpu.memory_space<vmem>>, vector<1x8x32xf32>
    %266 = vector.shape_cast %265 : vector<1x8x32xf32> to vector<8x32xf32>
    %c1_96 = arith.constant 1 : index
    %c0_97 = arith.constant 0 : index
    %c0_98 = arith.constant 0 : index
    %267 = vector.load %arg2[%c1_96, %c0_97, %c0_98] : memref<2x8x32xf32, #tpu.memory_space<vmem>>, vector<1x8x32xf32>
    %268 = vector.shape_cast %267 : vector<1x8x32xf32> to vector<8x32xf32>
    %c0_i32_99 = arith.constant 0 : i32
    %269 = arith.index_cast %c0_i32_99 : i32 to index
    %c0_100 = arith.constant 0 : index
    %c0_101 = arith.constant 0 : index
    %270 = vector.load %arg7[%269, %c0_100, %c0_101] : memref<8x8x128xbf16, #tpu.memory_space<vmem>>, vector<1x8x128xbf16>
    %271 = vector.shape_cast %270 : vector<1x8x128xbf16> to vector<8x128xbf16>
    %272 = arith.truncf %266 : vector<8x32xf32> to vector<8x32xbf16>
    %cst_102 = arith.constant dense<0.000000e+00> : vector<8x128xf32>
    %273 = tpu.matmul %272, %254, %cst_102 {dimension_numbers = #tpu.dot_dimension_numbers<[1], [0], [0], [1], [0, 0, 1, 1], [], []>} : vector<8x32xbf16>, vector<32x128xbf16>, vector<8x128xf32> -> vector<8x128xf32>
    %274 = arith.extf %271 : vector<8x128xbf16> to vector<8x128xf32>
    %275 = arith.addf %274, %273 : vector<8x128xf32>
    %276 = arith.mulf %275, %8 : vector<8x128xf32>
    %277 = math.tanh %276 : vector<8x128xf32>
    %cst_103 = arith.constant 1.000000e+00 : f32
    %278 = vector.broadcast %cst_103 : f32 to vector<8x128xf32>
    %279 = arith.addf %278, %277 : vector<8x128xf32>
    %cst_104 = arith.constant 5.000000e-01 : f32
    %280 = vector.broadcast %cst_104 : f32 to vector<8x128xf32>
    %281 = arith.mulf %280, %279 : vector<8x128xf32>
    %282 = arith.select %5, %277, %281 : vector<8x128xi1>, vector<8x128xf32>
    %283 = vector.extract_strided_slice %282 {offsets = [0, 0], sizes = [8, 32], strides = [1, 1]} : vector<8x128xf32> to vector<8x32xf32>
    %284 = vector.extract_strided_slice %282 {offsets = [0, 32], sizes = [8, 32], strides = [1, 1]} : vector<8x128xf32> to vector<8x32xf32>
    %285 = vector.extract_strided_slice %282 {offsets = [0, 64], sizes = [8, 32], strides = [1, 1]} : vector<8x128xf32> to vector<8x32xf32>
    %286 = vector.extract_strided_slice %282 {offsets = [0, 96], sizes = [8, 32], strides = [1, 1]} : vector<8x128xf32> to vector<8x32xf32>
    %287 = arith.mulf %284, %268 : vector<8x32xf32>
    %288 = arith.mulf %283, %285 : vector<8x32xf32>
    %289 = arith.addf %287, %288 : vector<8x32xf32>
    %290 = math.tanh %289 : vector<8x32xf32>
    %291 = arith.mulf %286, %290 : vector<8x32xf32>
    %292 = arith.truncf %291 : vector<8x32xf32> to vector<8x32xbf16>
    %293 = arith.index_cast %c0_i32_99 : i32 to index
    %c0_105 = arith.constant 0 : index
    %c0_106 = arith.constant 0 : index
    %294 = vector.load %arg6[%293, %c0_105, %c0_106] : memref<8x8x32xbf16, #tpu.memory_space<vmem>>, vector<1x8x32xbf16>
    %295 = vector.shape_cast %294 : vector<1x8x32xbf16> to vector<8x32xbf16>
    %296 = vector.shape_cast %292 : vector<8x32xbf16> to vector<1x8x32xbf16>
    tpu.vector_store %arg6[%293, %c0_105, %c0_106], %296 {strides = array<i32>} : memref<8x8x32xbf16, #tpu.memory_space<vmem>>, vector<1x8x32xbf16>,
    %c1_i32_107 = arith.constant 1 : i32
    %297 = arith.index_cast %c1_i32_107 : i32 to index
    %c0_108 = arith.constant 0 : index
    %c0_109 = arith.constant 0 : index
    %298 = vector.load %arg7[%297, %c0_108, %c0_109] : memref<8x8x128xbf16, #tpu.memory_space<vmem>>, vector<1x8x128xbf16>
    %299 = vector.shape_cast %298 : vector<1x8x128xbf16> to vector<8x128xbf16>
    %300 = arith.truncf %291 : vector<8x32xf32> to vector<8x32xbf16>
    %cst_110 = arith.constant dense<0.000000e+00> : vector<8x128xf32>
    %301 = tpu.matmul %300, %254, %cst_110 {dimension_numbers = #tpu.dot_dimension_numbers<[1], [0], [0], [1], [0, 0, 1, 1], [], []>} : vector<8x32xbf16>, vector<32x128xbf16>, vector<8x128xf32> -> vector<8x128xf32>
    %302 = arith.extf %299 : vector<8x128xbf16> to vector<8x128xf32>
    %303 = arith.addf %302, %301 : vector<8x128xf32>
    %304 = arith.mulf %303, %8 : vector<8x128xf32>
    %305 = math.tanh %304 : vector<8x128xf32>
    %cst_111 = arith.constant 1.000000e+00 : f32
    %306 = vector.broadcast %cst_111 : f32 to vector<8x128xf32>
    %307 = arith.addf %306, %305 : vector<8x128xf32>
    %cst_112 = arith.constant 5.000000e-01 : f32
    %308 = vector.broadcast %cst_112 : f32 to vector<8x128xf32>
    %309 = arith.mulf %308, %307 : vector<8x128xf32>
    %310 = arith.select %5, %305, %309 : vector<8x128xi1>, vector<8x128xf32>
    %311 = vector.extract_strided_slice %310 {offsets = [0, 0], sizes = [8, 32], strides = [1, 1]} : vector<8x128xf32> to vector<8x32xf32>
    %312 = vector.extract_strided_slice %310 {offsets = [0, 32], sizes = [8, 32], strides = [1, 1]} : vector<8x128xf32> to vector<8x32xf32>
    %313 = vector.extract_strided_slice %310 {offsets = [0, 64], sizes = [8, 32], strides = [1, 1]} : vector<8x128xf32> to vector<8x32xf32>
    %314 = vector.extract_strided_slice %310 {offsets = [0, 96], sizes = [8, 32], strides = [1, 1]} : vector<8x128xf32> to vector<8x32xf32>
    %315 = arith.mulf %312, %289 : vector<8x32xf32>
    %316 = arith.mulf %311, %313 : vector<8x32xf32>
    %317 = arith.addf %315, %316 : vector<8x32xf32>
    %318 = math.tanh %317 : vector<8x32xf32>
    %319 = arith.mulf %314, %318 : vector<8x32xf32>
    %320 = arith.truncf %319 : vector<8x32xf32> to vector<8x32xbf16>
    %321 = arith.index_cast %c1_i32_107 : i32 to index
    %c0_113 = arith.constant 0 : index
    %c0_114 = arith.constant 0 : index
    %322 = vector.load %arg6[%321, %c0_113, %c0_114] : memref<8x8x32xbf16, #tpu.memory_space<vmem>>, vector<1x8x32xbf16>
    %323 = vector.shape_cast %322 : vector<1x8x32xbf16> to vector<8x32xbf16>
    %324 = vector.shape_cast %320 : vector<8x32xbf16> to vector<1x8x32xbf16>
    tpu.vector_store %arg6[%321, %c0_113, %c0_114], %324 {strides = array<i32>} : memref<8x8x32xbf16, #tpu.memory_space<vmem>>, vector<1x8x32xbf16>,
    %c2_i32_115 = arith.constant 2 : i32
    %325 = arith.index_cast %c2_i32_115 : i32 to index
    %c0_116 = arith.constant 0 : index
    %c0_117 = arith.constant 0 : index
    %326 = vector.load %arg7[%325, %c0_116, %c0_117] : memref<8x8x128xbf16, #tpu.memory_space<vmem>>, vector<1x8x128xbf16>
    %327 = vector.shape_cast %326 : vector<1x8x128xbf16> to vector<8x128xbf16>
    %328 = arith.truncf %319 : vector<8x32xf32> to vector<8x32xbf16>
    %cst_118 = arith.constant dense<0.000000e+00> : vector<8x128xf32>
    %329 = tpu.matmul %328, %254, %cst_118 {dimension_numbers = #tpu.dot_dimension_numbers<[1], [0], [0], [1], [0, 0, 1, 1], [], []>} : vector<8x32xbf16>, vector<32x128xbf16>, vector<8x128xf32> -> vector<8x128xf32>
    %330 = arith.extf %327 : vector<8x128xbf16> to vector<8x128xf32>
    %331 = arith.addf %330, %329 : vector<8x128xf32>
    %332 = arith.mulf %331, %8 : vector<8x128xf32>
    %333 = math.tanh %332 : vector<8x128xf32>
    %cst_119 = arith.constant 1.000000e+00 : f32
    %334 = vector.broadcast %cst_119 : f32 to vector<8x128xf32>
    %335 = arith.addf %334, %333 : vector<8x128xf32>
    %cst_120 = arith.constant 5.000000e-01 : f32
    %336 = vector.broadcast %cst_120 : f32 to vector<8x128xf32>
    %337 = arith.mulf %336, %335 : vector<8x128xf32>
    %338 = arith.select %5, %333, %337 : vector<8x128xi1>, vector<8x128xf32>
    %339 = vector.extract_strided_slice %338 {offsets = [0, 0], sizes = [8, 32], strides = [1, 1]} : vector<8x128xf32> to vector<8x32xf32>
    %340 = vector.extract_strided_slice %338 {offsets = [0, 32], sizes = [8, 32], strides = [1, 1]} : vector<8x128xf32> to vector<8x32xf32>
    %341 = vector.extract_strided_slice %338 {offsets = [0, 64], sizes = [8, 32], strides = [1, 1]} : vector<8x128xf32> to vector<8x32xf32>
    %342 = vector.extract_strided_slice %338 {offsets = [0, 96], sizes = [8, 32], strides = [1, 1]} : vector<8x128xf32> to vector<8x32xf32>
    %343 = arith.mulf %340, %317 : vector<8x32xf32>
    %344 = arith.mulf %339, %341 : vector<8x32xf32>
    %345 = arith.addf %343, %344 : vector<8x32xf32>
    %346 = math.tanh %345 : vector<8x32xf32>
    %347 = arith.mulf %342, %346 : vector<8x32xf32>
    %348 = arith.truncf %347 : vector<8x32xf32> to vector<8x32xbf16>
    %349 = arith.index_cast %c2_i32_115 : i32 to index
    %c0_121 = arith.constant 0 : index
    %c0_122 = arith.constant 0 : index
    %350 = vector.load %arg6[%349, %c0_121, %c0_122] : memref<8x8x32xbf16, #tpu.memory_space<vmem>>, vector<1x8x32xbf16>
    %351 = vector.shape_cast %350 : vector<1x8x32xbf16> to vector<8x32xbf16>
    %352 = vector.shape_cast %348 : vector<8x32xbf16> to vector<1x8x32xbf16>
    tpu.vector_store %arg6[%349, %c0_121, %c0_122], %352 {strides = array<i32>} : memref<8x8x32xbf16, #tpu.memory_space<vmem>>, vector<1x8x32xbf16>,
    %c3_i32_123 = arith.constant 3 : i32
    %353 = arith.index_cast %c3_i32_123 : i32 to index
    %c0_124 = arith.constant 0 : index
    %c0_125 = arith.constant 0 : index
    %354 = vector.load %arg7[%353, %c0_124, %c0_125] : memref<8x8x128xbf16, #tpu.memory_space<vmem>>, vector<1x8x128xbf16>
    %355 = vector.shape_cast %354 : vector<1x8x128xbf16> to vector<8x128xbf16>
    %356 = arith.truncf %347 : vector<8x32xf32> to vector<8x32xbf16>
    %cst_126 = arith.constant dense<0.000000e+00> : vector<8x128xf32>
    %357 = tpu.matmul %356, %254, %cst_126 {dimension_numbers = #tpu.dot_dimension_numbers<[1], [0], [0], [1], [0, 0, 1, 1], [], []>} : vector<8x32xbf16>, vector<32x128xbf16>, vector<8x128xf32> -> vector<8x128xf32>
    %358 = arith.extf %355 : vector<8x128xbf16> to vector<8x128xf32>
    %359 = arith.addf %358, %357 : vector<8x128xf32>
    %360 = arith.mulf %359, %8 : vector<8x128xf32>
    %361 = math.tanh %360 : vector<8x128xf32>
    %cst_127 = arith.constant 1.000000e+00 : f32
    %362 = vector.broadcast %cst_127 : f32 to vector<8x128xf32>
    %363 = arith.addf %362, %361 : vector<8x128xf32>
    %cst_128 = arith.constant 5.000000e-01 : f32
    %364 = vector.broadcast %cst_128 : f32 to vector<8x128xf32>
    %365 = arith.mulf %364, %363 : vector<8x128xf32>
    %366 = arith.select %5, %361, %365 : vector<8x128xi1>, vector<8x128xf32>
    %367 = vector.extract_strided_slice %366 {offsets = [0, 0], sizes = [8, 32], strides = [1, 1]} : vector<8x128xf32> to vector<8x32xf32>
    %368 = vector.extract_strided_slice %366 {offsets = [0, 32], sizes = [8, 32], strides = [1, 1]} : vector<8x128xf32> to vector<8x32xf32>
    %369 = vector.extract_strided_slice %366 {offsets = [0, 64], sizes = [8, 32], strides = [1, 1]} : vector<8x128xf32> to vector<8x32xf32>
    %370 = vector.extract_strided_slice %366 {offsets = [0, 96], sizes = [8, 32], strides = [1, 1]} : vector<8x128xf32> to vector<8x32xf32>
    %371 = arith.mulf %368, %345 : vector<8x32xf32>
    %372 = arith.mulf %367, %369 : vector<8x32xf32>
    %373 = arith.addf %371, %372 : vector<8x32xf32>
    %374 = math.tanh %373 : vector<8x32xf32>
    %375 = arith.mulf %370, %374 : vector<8x32xf32>
    %376 = arith.truncf %375 : vector<8x32xf32> to vector<8x32xbf16>
    %377 = arith.index_cast %c3_i32_123 : i32 to index
    %c0_129 = arith.constant 0 : index
    %c0_130 = arith.constant 0 : index
    %378 = vector.load %arg6[%377, %c0_129, %c0_130] : memref<8x8x32xbf16, #tpu.memory_space<vmem>>, vector<1x8x32xbf16>
    %379 = vector.shape_cast %378 : vector<1x8x32xbf16> to vector<8x32xbf16>
    %380 = vector.shape_cast %376 : vector<8x32xbf16> to vector<1x8x32xbf16>
    tpu.vector_store %arg6[%377, %c0_129, %c0_130], %380 {strides = array<i32>} : memref<8x8x32xbf16, #tpu.memory_space<vmem>>, vector<1x8x32xbf16>,
    %c4_i32_131 = arith.constant 4 : i32
    %381 = arith.index_cast %c4_i32_131 : i32 to index
    %c0_132 = arith.constant 0 : index
    %c0_133 = arith.constant 0 : index
    %382 = vector.load %arg7[%381, %c0_132, %c0_133] : memref<8x8x128xbf16, #tpu.memory_space<vmem>>, vector<1x8x128xbf16>
    %383 = vector.shape_cast %382 : vector<1x8x128xbf16> to vector<8x128xbf16>
    %384 = arith.truncf %375 : vector<8x32xf32> to vector<8x32xbf16>
    %cst_134 = arith.constant dense<0.000000e+00> : vector<8x128xf32>
    %385 = tpu.matmul %384, %254, %cst_134 {dimension_numbers = #tpu.dot_dimension_numbers<[1], [0], [0], [1], [0, 0, 1, 1], [], []>} : vector<8x32xbf16>, vector<32x128xbf16>, vector<8x128xf32> -> vector<8x128xf32>
    %386 = arith.extf %383 : vector<8x128xbf16> to vector<8x128xf32>
    %387 = arith.addf %386, %385 : vector<8x128xf32>
    %388 = arith.mulf %387, %8 : vector<8x128xf32>
    %389 = math.tanh %388 : vector<8x128xf32>
    %cst_135 = arith.constant 1.000000e+00 : f32
    %390 = vector.broadcast %cst_135 : f32 to vector<8x128xf32>
    %391 = arith.addf %390, %389 : vector<8x128xf32>
    %cst_136 = arith.constant 5.000000e-01 : f32
    %392 = vector.broadcast %cst_136 : f32 to vector<8x128xf32>
    %393 = arith.mulf %392, %391 : vector<8x128xf32>
    %394 = arith.select %5, %389, %393 : vector<8x128xi1>, vector<8x128xf32>
    %395 = vector.extract_strided_slice %394 {offsets = [0, 0], sizes = [8, 32], strides = [1, 1]} : vector<8x128xf32> to vector<8x32xf32>
    %396 = vector.extract_strided_slice %394 {offsets = [0, 32], sizes = [8, 32], strides = [1, 1]} : vector<8x128xf32> to vector<8x32xf32>
    %397 = vector.extract_strided_slice %394 {offsets = [0, 64], sizes = [8, 32], strides = [1, 1]} : vector<8x128xf32> to vector<8x32xf32>
    %398 = vector.extract_strided_slice %394 {offsets = [0, 96], sizes = [8, 32], strides = [1, 1]} : vector<8x128xf32> to vector<8x32xf32>
    %399 = arith.mulf %396, %373 : vector<8x32xf32>
    %400 = arith.mulf %395, %397 : vector<8x32xf32>
    %401 = arith.addf %399, %400 : vector<8x32xf32>
    %402 = math.tanh %401 : vector<8x32xf32>
    %403 = arith.mulf %398, %402 : vector<8x32xf32>
    %404 = arith.truncf %403 : vector<8x32xf32> to vector<8x32xbf16>
    %405 = arith.index_cast %c4_i32_131 : i32 to index
    %c0_137 = arith.constant 0 : index
    %c0_138 = arith.constant 0 : index
    %406 = vector.load %arg6[%405, %c0_137, %c0_138] : memref<8x8x32xbf16, #tpu.memory_space<vmem>>, vector<1x8x32xbf16>
    %407 = vector.shape_cast %406 : vector<1x8x32xbf16> to vector<8x32xbf16>
    %408 = vector.shape_cast %404 : vector<8x32xbf16> to vector<1x8x32xbf16>
    tpu.vector_store %arg6[%405, %c0_137, %c0_138], %408 {strides = array<i32>} : memref<8x8x32xbf16, #tpu.memory_space<vmem>>, vector<1x8x32xbf16>,
    %c5_i32_139 = arith.constant 5 : i32
    %409 = arith.index_cast %c5_i32_139 : i32 to index
    %c0_140 = arith.constant 0 : index
    %c0_141 = arith.constant 0 : index
    %410 = vector.load %arg7[%409, %c0_140, %c0_141] : memref<8x8x128xbf16, #tpu.memory_space<vmem>>, vector<1x8x128xbf16>
    %411 = vector.shape_cast %410 : vector<1x8x128xbf16> to vector<8x128xbf16>
    %412 = arith.truncf %403 : vector<8x32xf32> to vector<8x32xbf16>
    %cst_142 = arith.constant dense<0.000000e+00> : vector<8x128xf32>
    %413 = tpu.matmul %412, %254, %cst_142 {dimension_numbers = #tpu.dot_dimension_numbers<[1], [0], [0], [1], [0, 0, 1, 1], [], []>} : vector<8x32xbf16>, vector<32x128xbf16>, vector<8x128xf32> -> vector<8x128xf32>
    %414 = arith.extf %411 : vector<8x128xbf16> to vector<8x128xf32>
    %415 = arith.addf %414, %413 : vector<8x128xf32>
    %416 = arith.mulf %415, %8 : vector<8x128xf32>
    %417 = math.tanh %416 : vector<8x128xf32>
    %cst_143 = arith.constant 1.000000e+00 : f32
    %418 = vector.broadcast %cst_143 : f32 to vector<8x128xf32>
    %419 = arith.addf %418, %417 : vector<8x128xf32>
    %cst_144 = arith.constant 5.000000e-01 : f32
    %420 = vector.broadcast %cst_144 : f32 to vector<8x128xf32>
    %421 = arith.mulf %420, %419 : vector<8x128xf32>
    %422 = arith.select %5, %417, %421 : vector<8x128xi1>, vector<8x128xf32>
    %423 = vector.extract_strided_slice %422 {offsets = [0, 0], sizes = [8, 32], strides = [1, 1]} : vector<8x128xf32> to vector<8x32xf32>
    %424 = vector.extract_strided_slice %422 {offsets = [0, 32], sizes = [8, 32], strides = [1, 1]} : vector<8x128xf32> to vector<8x32xf32>
    %425 = vector.extract_strided_slice %422 {offsets = [0, 64], sizes = [8, 32], strides = [1, 1]} : vector<8x128xf32> to vector<8x32xf32>
    %426 = vector.extract_strided_slice %422 {offsets = [0, 96], sizes = [8, 32], strides = [1, 1]} : vector<8x128xf32> to vector<8x32xf32>
    %427 = arith.mulf %424, %401 : vector<8x32xf32>
    %428 = arith.mulf %423, %425 : vector<8x32xf32>
    %429 = arith.addf %427, %428 : vector<8x32xf32>
    %430 = math.tanh %429 : vector<8x32xf32>
    %431 = arith.mulf %426, %430 : vector<8x32xf32>
    %432 = arith.truncf %431 : vector<8x32xf32> to vector<8x32xbf16>
    %433 = arith.index_cast %c5_i32_139 : i32 to index
    %c0_145 = arith.constant 0 : index
    %c0_146 = arith.constant 0 : index
    %434 = vector.load %arg6[%433, %c0_145, %c0_146] : memref<8x8x32xbf16, #tpu.memory_space<vmem>>, vector<1x8x32xbf16>
    %435 = vector.shape_cast %434 : vector<1x8x32xbf16> to vector<8x32xbf16>
    %436 = vector.shape_cast %432 : vector<8x32xbf16> to vector<1x8x32xbf16>
    tpu.vector_store %arg6[%433, %c0_145, %c0_146], %436 {strides = array<i32>} : memref<8x8x32xbf16, #tpu.memory_space<vmem>>, vector<1x8x32xbf16>,
    %c6_i32_147 = arith.constant 6 : i32
    %437 = arith.index_cast %c6_i32_147 : i32 to index
    %c0_148 = arith.constant 0 : index
    %c0_149 = arith.constant 0 : index
    %438 = vector.load %arg7[%437, %c0_148, %c0_149] : memref<8x8x128xbf16, #tpu.memory_space<vmem>>, vector<1x8x128xbf16>
    %439 = vector.shape_cast %438 : vector<1x8x128xbf16> to vector<8x128xbf16>
    %440 = arith.truncf %431 : vector<8x32xf32> to vector<8x32xbf16>
    %cst_150 = arith.constant dense<0.000000e+00> : vector<8x128xf32>
    %441 = tpu.matmul %440, %254, %cst_150 {dimension_numbers = #tpu.dot_dimension_numbers<[1], [0], [0], [1], [0, 0, 1, 1], [], []>} : vector<8x32xbf16>, vector<32x128xbf16>, vector<8x128xf32> -> vector<8x128xf32>
    %442 = arith.extf %439 : vector<8x128xbf16> to vector<8x128xf32>
    %443 = arith.addf %442, %441 : vector<8x128xf32>
    %444 = arith.mulf %443, %8 : vector<8x128xf32>
    %445 = math.tanh %444 : vector<8x128xf32>
    %cst_151 = arith.constant 1.000000e+00 : f32
    %446 = vector.broadcast %cst_151 : f32 to vector<8x128xf32>
    %447 = arith.addf %446, %445 : vector<8x128xf32>
    %cst_152 = arith.constant 5.000000e-01 : f32
    %448 = vector.broadcast %cst_152 : f32 to vector<8x128xf32>
    %449 = arith.mulf %448, %447 : vector<8x128xf32>
    %450 = arith.select %5, %445, %449 : vector<8x128xi1>, vector<8x128xf32>
    %451 = vector.extract_strided_slice %450 {offsets = [0, 0], sizes = [8, 32], strides = [1, 1]} : vector<8x128xf32> to vector<8x32xf32>
    %452 = vector.extract_strided_slice %450 {offsets = [0, 32], sizes = [8, 32], strides = [1, 1]} : vector<8x128xf32> to vector<8x32xf32>
    %453 = vector.extract_strided_slice %450 {offsets = [0, 64], sizes = [8, 32], strides = [1, 1]} : vector<8x128xf32> to vector<8x32xf32>
    %454 = vector.extract_strided_slice %450 {offsets = [0, 96], sizes = [8, 32], strides = [1, 1]} : vector<8x128xf32> to vector<8x32xf32>
    %455 = arith.mulf %452, %429 : vector<8x32xf32>
    %456 = arith.mulf %451, %453 : vector<8x32xf32>
    %457 = arith.addf %455, %456 : vector<8x32xf32>
    %458 = math.tanh %457 : vector<8x32xf32>
    %459 = arith.mulf %454, %458 : vector<8x32xf32>
    %460 = arith.truncf %459 : vector<8x32xf32> to vector<8x32xbf16>
    %461 = arith.index_cast %c6_i32_147 : i32 to index
    %c0_153 = arith.constant 0 : index
    %c0_154 = arith.constant 0 : index
    %462 = vector.load %arg6[%461, %c0_153, %c0_154] : memref<8x8x32xbf16, #tpu.memory_space<vmem>>, vector<1x8x32xbf16>
    %463 = vector.shape_cast %462 : vector<1x8x32xbf16> to vector<8x32xbf16>
    %464 = vector.shape_cast %460 : vector<8x32xbf16> to vector<1x8x32xbf16>
    tpu.vector_store %arg6[%461, %c0_153, %c0_154], %464 {strides = array<i32>} : memref<8x8x32xbf16, #tpu.memory_space<vmem>>, vector<1x8x32xbf16>,
    %c7_i32_155 = arith.constant 7 : i32
    %465 = arith.index_cast %c7_i32_155 : i32 to index
    %c0_156 = arith.constant 0 : index
    %c0_157 = arith.constant 0 : index
    %466 = vector.load %arg7[%465, %c0_156, %c0_157] : memref<8x8x128xbf16, #tpu.memory_space<vmem>>, vector<1x8x128xbf16>
    %467 = vector.shape_cast %466 : vector<1x8x128xbf16> to vector<8x128xbf16>
    %468 = arith.truncf %459 : vector<8x32xf32> to vector<8x32xbf16>
    %cst_158 = arith.constant dense<0.000000e+00> : vector<8x128xf32>
    %469 = tpu.matmul %468, %254, %cst_158 {dimension_numbers = #tpu.dot_dimension_numbers<[1], [0], [0], [1], [0, 0, 1, 1], [], []>} : vector<8x32xbf16>, vector<32x128xbf16>, vector<8x128xf32> -> vector<8x128xf32>
    %470 = arith.extf %467 : vector<8x128xbf16> to vector<8x128xf32>
    %471 = arith.addf %470, %469 : vector<8x128xf32>
    %472 = arith.mulf %471, %8 : vector<8x128xf32>
    %473 = math.tanh %472 : vector<8x128xf32>
    %cst_159 = arith.constant 1.000000e+00 : f32
    %474 = vector.broadcast %cst_159 : f32 to vector<8x128xf32>
    %475 = arith.addf %474, %473 : vector<8x128xf32>
    %cst_160 = arith.constant 5.000000e-01 : f32
    %476 = vector.broadcast %cst_160 : f32 to vector<8x128xf32>
    %477 = arith.mulf %476, %475 : vector<8x128xf32>
    %478 = arith.select %5, %473, %477 : vector<8x128xi1>, vector<8x128xf32>
    %479 = vector.extract_strided_slice %478 {offsets = [0, 0], sizes = [8, 32], strides = [1, 1]} : vector<8x128xf32> to vector<8x32xf32>
    %480 = vector.extract_strided_slice %478 {offsets = [0, 32], sizes = [8, 32], strides = [1, 1]} : vector<8x128xf32> to vector<8x32xf32>
    %481 = vector.extract_strided_slice %478 {offsets = [0, 64], sizes = [8, 32], strides = [1, 1]} : vector<8x128xf32> to vector<8x32xf32>
    %482 = vector.extract_strided_slice %478 {offsets = [0, 96], sizes = [8, 32], strides = [1, 1]} : vector<8x128xf32> to vector<8x32xf32>
    %483 = arith.mulf %480, %457 : vector<8x32xf32>
    %484 = arith.mulf %479, %481 : vector<8x32xf32>
    %485 = arith.addf %483, %484 : vector<8x32xf32>
    %486 = math.tanh %485 : vector<8x32xf32>
    %487 = arith.mulf %482, %486 : vector<8x32xf32>
    %488 = arith.truncf %487 : vector<8x32xf32> to vector<8x32xbf16>
    %489 = arith.index_cast %c7_i32_155 : i32 to index
    %c0_161 = arith.constant 0 : index
    %c0_162 = arith.constant 0 : index
    %490 = vector.load %arg6[%489, %c0_161, %c0_162] : memref<8x8x32xbf16, #tpu.memory_space<vmem>>, vector<1x8x32xbf16>
    %491 = vector.shape_cast %490 : vector<1x8x32xbf16> to vector<8x32xbf16>
    %492 = vector.shape_cast %488 : vector<8x32xbf16> to vector<1x8x32xbf16>
    tpu.vector_store %arg6[%489, %c0_161, %c0_162], %492 {strides = array<i32>} : memref<8x8x32xbf16, #tpu.memory_space<vmem>>, vector<1x8x32xbf16>,
    %c8_i32_163 = arith.constant 8 : i32
    return
  }
}

</mosaic_0001>

<llo_original>
// kernel: tpu_custom_call.1
$region0: #{tpu_custom_call.1}
  #allocation0 [shape = 'u32[]', space=smem, size = 0x4, offset = 0x4, fixed_abs, tag = 'smem constant byte address 0x4 - core index']
  #allocation1 [shape = 'u32[144,128]{1,0:T(1,128)}', space=vmem, size = 0x12000, scoped, tag = 'internal scratch']
  #allocation2 [shape = 'bf16[8,8,128]{2,1,0:T(8,128)(2,1)}', space=vmem, size = 0x4000, scoped, tag = 'scratch operand']
  %s0 = inlined_call_operand.hbm [shape: bf16[8,8,32], index: 0, kind: input, shape index: {}]
  %s1 = inlined_call_operand.hbm [shape: f32[2,8,32], index: 1, kind: input, shape index: {}]
  %s2 = inlined_call_operand.hbm [shape: f32[2,8,32], index: 2, kind: input, shape index: {}]
  %s3 = inlined_call_operand.hbm [shape: bf16[2,32,128], index: 3, kind: input, shape index: {}]
  %s4 = inlined_call_operand.hbm [shape: bf16[2,32,128], index: 4, kind: input, shape index: {}]
  %s5 = inlined_call_operand.vmem [shape: f32[2,1,128], index: 5, kind: input, shape index: {}]
  %s6 = inlined_call_operand.hbm [shape: bf16[8,8,32], index: 6, kind: output, shape index: {}]
  %s7 = sld [smem:[#allocation0]]
  $region54: #{tpu_custom_call.1} parent=0
    _
  %s9 = ssub.s32 1, %s7
  %s10 = scalar_select 0, %s9, %s7
  $region1: #{tpu_custom_call.1} parent=0
    #allocation3 [shape = 'u8[16384]{0}', space=vmem, size = 0x4000, scoped, tag = 'input window, operand 0, single buffered']
    #allocation4 [shape = 's32[1]{0}', space=sflag, size = 0x4, scoped, tag = 'scoped memory for tpu_custom_call.1']
    #allocation5 [shape = 's32[1]{0}', space=sflag, size = 0x4, scoped, tag = 'scoped memory for tpu_custom_call.1']
    #allocation6 [shape = 'u8[8192]{0}', space=vmem, size = 0x2000, scoped, tag = 'input window, operand 1, single buffered']
    #allocation7 [shape = 's32[1]{0}', space=sflag, size = 0x4, scoped, tag = 'scoped memory for tpu_custom_call.1']
    #allocation8 [shape = 'u8[8192]{0}', space=vmem, size = 0x2000, scoped, tag = 'input window, operand 2, single buffered']
    #allocation9 [shape = 'u8[16384]{0}', space=vmem, size = 0x4000, scoped, tag = 'input window, operand 3, single buffered']
    #allocation10 [shape = 's32[1]{0}', space=sflag, size = 0x4, scoped, tag = 'scoped memory for tpu_custom_call.1']
    #allocation11 [shape = 'u8[16384]{0}', space=vmem, size = 0x4000, scoped, tag = 'input window, operand 4, single buffered']
    #allocation12 [shape = 'u8[16384]{0}', space=vmem, size = 0x4000, scoped, tag = 'output window, operand 0, single buffered']
    %11 = vsyncpa [#allocation4], 0
    %12 = vsyncpa [#allocation7], 0
    %13 = vsyncpa [#allocation10], 0
    %14 = vsyncpa [#allocation5], 0
    // Predicated region
    $region2: #{tpu_custom_call.1} parent=1 // pred_check
      _
    $region3: #{tpu_custom_call.1} parent=1 // pred_check_branch
      %16 = sbr.rel (0) target = $region5
    $region4: #{tpu_custom_call.1} parent=1 // pred_region
      %s18 = ssub.s32 512, 512
      %19 = vsyncadd [#allocation4], %s18
      %s20 = sshll.u32 [#allocation3], 4
      %s21 = int_to_ptr.vmem [resolvable:$true] %s20
      %26 = dma.hbm_to_vmem [thread:$0]  %s0, 512, %s21, [#allocation4], 64, 64, 4
    $region5: #{tpu_custom_call.1} parent=1 // pred_fallthru
      _
    // Predicated region
    $region6: #{tpu_custom_call.1} parent=1 // pred_check
      _
    $region7: #{tpu_custom_call.1} parent=1 // pred_check_branch
      %28 = sbr.rel (0) target = $region9
    $region8: #{tpu_custom_call.1} parent=1 // pred_region
      %s30 = ssub.s32 256, 256
      %31 = vsyncadd [#allocation7], %s30
      %s32 = sshll.u32 [#allocation6], 4
      %s33 = int_to_ptr.vmem [resolvable:$true] %s32
      %38 = dma.hbm_to_vmem [thread:$0]  %s1, 256, %s33, [#allocation7], 128, 128, 8
    $region9: #{tpu_custom_call.1} parent=1 // pred_fallthru
      _
    // Predicated region
    $region10: #{tpu_custom_call.1} parent=1 // pred_check
      _
    $region11: #{tpu_custom_call.1} parent=1 // pred_check_branch
      %40 = sbr.rel (0) target = $region13
    $region12: #{tpu_custom_call.1} parent=1 // pred_region
      %s42 = ssub.s32 256, 256
      %43 = vsyncadd [#allocation7], %s42
      %s44 = sshll.u32 [#allocation8], 4
      %s45 = int_to_ptr.vmem [resolvable:$true] %s44
      %50 = dma.hbm_to_vmem [thread:$0]  %s2, 256, %s45, [#allocation7], 128, 128, 8
    $region13: #{tpu_custom_call.1} parent=1 // pred_fallthru
      _
    // Predicated region
    $region14: #{tpu_custom_call.1} parent=1 // pred_check
      _
    $region15: #{tpu_custom_call.1} parent=1 // pred_check_branch
      %52 = sbr.rel (0) target = $region17
    $region16: #{tpu_custom_call.1} parent=1 // pred_region
      %s54 = ssub.s32 512, 512
      %55 = vsyncadd [#allocation10], %s54
      %s56 = sshll.u32 [#allocation9], 4
      %s57 = int_to_ptr.vmem [resolvable:$true] %s56
      %62 = dma.hbm_to_vmem [thread:$0]  %s3, 512, %s57, [#allocation10], 64, 64, 4
    $region17: #{tpu_custom_call.1} parent=1 // pred_fallthru
      _
    // Predicated region
    $region18: #{tpu_custom_call.1} parent=1 // pred_check
      _
    $region19: #{tpu_custom_call.1} parent=1 // pred_check_branch
      %64 = sbr.rel (0) target = $region21
    $region20: #{tpu_custom_call.1} parent=1 // pred_region
      %s66 = ssub.s32 512, 512
      %67 = vsyncadd [#allocation10], %s66
      %s68 = sshll.u32 [#allocation11], 4
      %s69 = int_to_ptr.vmem [resolvable:$true] %s68
      %74 = dma.hbm_to_vmem [thread:$0]  %s4, 512, %s69, [#allocation10], 64, 64, 4
    $region21: #{tpu_custom_call.1} parent=1 // pred_fallthru
      _
    // Predicated region
    $region22: #{tpu_custom_call.1} parent=1 // pred_check
      _
    $region23: #{tpu_custom_call.1} parent=1 // pred_check_branch
      %76 = sbr.rel (0) target = $region25
    $region24: #{tpu_custom_call.1} parent=1 // pred_region
      _
    $region25: #{tpu_custom_call.1} parent=1 // pred_fallthru
      _
    // Predicated region
    $region26: #{tpu_custom_call.1} parent=1 // pred_check
      _
    $region27: #{tpu_custom_call.1} parent=1 // pred_check_branch
      %78 = sbr.rel (0) target = $region29
    $region28: #{tpu_custom_call.1} parent=1 // pred_region
      %79 = dma.done [#allocation4], 512
    $region29: #{tpu_custom_call.1} parent=1 // pred_fallthru
      _
    // Predicated region
    $region30: #{tpu_custom_call.1} parent=1 // pred_check
      _
    $region31: #{tpu_custom_call.1} parent=1 // pred_check_branch
      %81 = sbr.rel (0) target = $region33
    $region32: #{tpu_custom_call.1} parent=1 // pred_region
      %82 = dma.done [#allocation7], 256
    $region33: #{tpu_custom_call.1} parent=1 // pred_fallthru
      _
    // Predicated region
    $region34: #{tpu_custom_call.1} parent=1 // pred_check
      _
    $region35: #{tpu_custom_call.1} parent=1 // pred_check_branch
      %84 = sbr.rel (0) target = $region37
    $region36: #{tpu_custom_call.1} parent=1 // pred_region
      %85 = dma.done [#allocation7], 256
    $region37: #{tpu_custom_call.1} parent=1 // pred_fallthru
      _
    // Predicated region
    $region38: #{tpu_custom_call.1} parent=1 // pred_check
      _
    $region39: #{tpu_custom_call.1} parent=1 // pred_check_branch
      %87 = sbr.rel (0) target = $region41
    $region40: #{tpu_custom_call.1} parent=1 // pred_region
      %88 = dma.done [#allocation10], 512
    $region41: #{tpu_custom_call.1} parent=1 // pred_fallthru
      _
    // Predicated region
    $region42: #{tpu_custom_call.1} parent=1 // pred_check
      _
    $region43: #{tpu_custom_call.1} parent=1 // pred_check_branch
      %90 = sbr.rel (0) target = $region45
    $region44: #{tpu_custom_call.1} parent=1 // pred_region
      %91 = dma.done [#allocation10], 512
    $region45: #{tpu_custom_call.1} parent=1 // pred_fallthru
      _
    %v93 = vlaneseq
    %v94 = vand.u32 %v93, 127
    %vm95 = vcmp.ge.s32.totalorder %v94, 64
    %vm96 = vcmp.lt.s32.totalorder %v94, 96
    %vm97 = vmand %vm95, %vm96
    %v98 = vsel %vm97, 1.0, 0.5
    %v99 = vld [vmem:[#allocation9] sm:$0xf]
    %v100 = vld [vmem:[#allocation9 + $0x4] sm:$0xf]
    %v101 = vld [vmem:[#allocation9 + $0x8] sm:$0xf]
    %v102 = vld [vmem:[#allocation9 + $0xc] sm:$0xf]
    %v103 = vld [vmem:[#allocation11] sm:$0xf]
    %v104 = vld [vmem:[#allocation11 + $0x4] sm:$0xf]
    %v105 = vld [vmem:[#allocation11 + $0x8] sm:$0xf]
    %v106 = vld [vmem:[#allocation11 + $0xc] sm:$0xf]
    %v107 = vld [vmem:[%s5] sm:$0x1]
    %v108 = vld [vmem:[#allocation3] sm:$0xf]
    %v109 = vld [vmem:[#allocation3 + $0x4] sm:$0xf]
    %v110 = vld [vmem:[#allocation3 + $0x8] sm:$0xf]
    %v111 = vld [vmem:[#allocation3 + $0xc] sm:$0xf]
    %v112 = vld [vmem:[#allocation3 + $0x10] sm:$0xf]
    %v113 = vld [vmem:[#allocation3 + $0x14] sm:$0xf]
    %v114 = vld [vmem:[#allocation3 + $0x18] sm:$0xf]
    %v115 = vld [vmem:[#allocation3 + $0x1c] sm:$0xf]
    %v117 = vlaneseq
    %v118 = vshrl.u32 %v117, 7
    %v119 = vsub.s32 0, %v118
    %v120 = vrot.slane %v107, %v119
    %v130 = vunpack.c.l.b16 %v108
    %v131 = vunpack.c.l.b16 %v109
    %v132 = vunpack.c.l.b16 %v110
    %v133 = vunpack.c.l.b16 %v111
    %v134 = vunpack.c.l.b16 %v112
    %v135 = vunpack.c.l.b16 %v113
    %v136 = vunpack.c.l.b16 %v114
    %v137 = vunpack.c.l.b16 %v115
    %v138 = vpack.c.b16 %v131, %v130
    %v139 = vpack.c.b16 %v133, %v132
    %v140 = vpack.c.b16 %v135, %v134
    %v141 = vpack.c.b16 %v137, %v136
    %v146 = vunpack.c.l.b16 %v99
    %v147 = vunpack.c.l.b16 %v100
    %v148 = vunpack.c.l.b16 %v101
    %v149 = vunpack.c.l.b16 %v102
    %v150 = vpack.c.b16 %v147, %v146
    %v151 = vpack.c.b16 %v149, %v148
    %vm154 = vcmask 261120
    %v156 = vsel %vm154, %v138, 0
    %v159 = vsel %vm154, %v139, 0
    %v162 = vsel %vm154, %v140, 0
    %v165 = vsel %vm154, %v141, 0
    %167 = vmatprep.subr.bf16.mxu0 0
    %168 = vmatpush1.bf16.msra.mxu0 0
    %169 = vmatprep.subr.bf16.mxu0 0
    %170 = vmatpush1.bf16.msra.mxu0 0
    %171 = vmatprep.subr.bf16.mxu0 0
    %172 = vmatpush1.bf16.msra.mxu0 0
    %173 = vmatprep.subr.bf16.mxu0 0
    %174 = vmatpush1.bf16.msra.mxu0 0
    %175 = vmatprep.subr.bf16.mxu0 0
    %176 = vmatpush1.bf16.msra.mxu0 0
    %177 = vmatprep.subr.bf16.mxu0 0
    %178 = vmatpush1.bf16.msra.mxu0 0
    %179 = vmatprep.subr.bf16.mxu0 0
    %180 = vmatpush1.bf16.msra.mxu0 %v151
    %181 = vmatprep.subr.bf16.mxu0 0
    %182 = vmatpush1.bf16.msra.mxu0 %v150
    %183 = vmatprep.subr.bf16.mxu0 0
    %184 = vmatpush2.bf16.msra.mxu0 0
    %185 = vmatprep.subr.bf16.mxu0 0
    %186 = vmatpush2.bf16.msra.mxu0 0
    %187 = vmatprep.subr.bf16.mxu0 0
    %188 = vmatpush2.bf16.msra.mxu0 0
    %189 = vmatprep.subr.bf16.mxu0 0
    %190 = vmatpush2.bf16.msra.mxu0 0
    %191 = vmatprep.subr.bf16.mxu0 0
    %192 = vmatpush2.bf16.msra.mxu0 0
    %193 = vmatprep.subr.bf16.mxu0 0
    %194 = vmatpush2.bf16.msra.mxu0 0
    %195 = vmatprep.subr.bf16.mxu0 0
    %196 = vmatpush2.bf16.msra.mxu0 0
    %197 = vmatprep.subr.bf16.mxu0 0
    %198 = vmatpush2.bf16.msra.mxu0 0
    %199 = vmatprep.mubr.bf16.mxu0 0
    %200 = vmatmul.mubr.bf16.gmra.mxu0 %v156
    %v201 = vpop.f32.mrf.mxu0
    %v202 = vadd.f32 %v120, %v201
    %v203 = vpop.f32.mrf.mxu0
    %v204 = vpop.f32.mrf.mxu0
    %v205 = vadd.f32 %v120, %v204
    %v206 = vpop.f32.mrf.mxu0
    %207 = vmatprep.mubr.bf16.mxu0 0
    %208 = vmatmul.mubr.bf16.gmra.mxu0 %v159
    %v209 = vpop.f32.mrf.mxu0
    %v210 = vadd.f32 %v120, %v209
    %v211 = vpop.f32.mrf.mxu0
    %v212 = vpop.f32.mrf.mxu0
    %v213 = vadd.f32 %v120, %v212
    %v214 = vpop.f32.mrf.mxu0
    %215 = vmatprep.mubr.bf16.mxu0 0
    %216 = vmatmul.mubr.bf16.gmra.mxu0 %v162
    %v217 = vpop.f32.mrf.mxu0
    %v218 = vadd.f32 %v120, %v217
    %v219 = vpop.f32.mrf.mxu0
    %v220 = vpop.f32.mrf.mxu0
    %v221 = vadd.f32 %v120, %v220
    %v222 = vpop.f32.mrf.mxu0
    %223 = vmatprep.mubr.bf16.mxu0 0
    %224 = vmatmul.mubr.bf16.gmra.mxu0 %v165
    %v225 = vpop.f32.mrf.mxu0
    %v226 = vadd.f32 %v120, %v225
    %v227 = vpop.f32.mrf.mxu0
    %v228 = vpop.f32.mrf.mxu0
    %v229 = vadd.f32 %v120, %v228
    %v230 = vpop.f32.mrf.mxu0
    %231 = vdwg.mxu0
    %v232 = vpack.c.bf16 %v202, %v202
    %v233 = vpack.c.bf16 %v205, %v205
    %v234 = vpack.c.bf16 %v210, %v210
    %v235 = vpack.c.bf16 %v213, %v213
    %v236 = vpack.c.bf16 %v218, %v218
    %v237 = vpack.c.bf16 %v221, %v221
    %v238 = vpack.c.bf16 %v226, %v226
    %v239 = vpack.c.bf16 %v229, %v229
    %240 = vst [vmem:[#allocation2] sm:$0xf] %v232
    %241 = vst [vmem:[#allocation2 + $0x4] sm:$0xf] %v233
    %242 = vst [vmem:[#allocation2 + $0x8] sm:$0xf] %v234
    %243 = vst [vmem:[#allocation2 + $0xc] sm:$0xf] %v235
    %244 = vst [vmem:[#allocation2 + $0x10] sm:$0xf] %v236
    %245 = vst [vmem:[#allocation2 + $0x14] sm:$0xf] %v237
    %246 = vst [vmem:[#allocation2 + $0x18] sm:$0xf] %v238
    %247 = vst [vmem:[#allocation2 + $0x1c] sm:$0xf] %v239
    %v248 = vld [vmem:[#allocation6] sm:$0xff]
    %v249 = vld [vmem:[#allocation8] sm:$0xff]
    %v250 = vld [vmem:[#allocation2] sm:$0xf]
    %v251 = vpack.c.bf16 %v248, %v248
    %v256 = vunpack.c.l.b16 %v103
    %v257 = vunpack.c.l.b16 %v104
    %v258 = vunpack.c.l.b16 %v105
    %v259 = vunpack.c.l.b16 %v106
    %v260 = vpack.c.b16 %v257, %v256
    %v261 = vpack.c.b16 %v259, %v258
    %v265 = vsel %vm154, %v251, 0
    %267 = vmatprep.subr.bf16.mxu0 0
    %268 = vmatpush1.bf16.msra.mxu0 0
    %269 = vmatprep.subr.bf16.mxu0 0
    %270 = vmatpush1.bf16.msra.mxu0 0
    %271 = vmatprep.subr.bf16.mxu0 0
    %272 = vmatpush1.bf16.msra.mxu0 0
    %273 = vmatprep.subr.bf16.mxu0 0
    %274 = vmatpush1.bf16.msra.mxu0 0
    %275 = vmatprep.subr.bf16.mxu0 0
    %276 = vmatpush1.bf16.msra.mxu0 0
    %277 = vmatprep.subr.bf16.mxu0 0
    %278 = vmatpush1.bf16.msra.mxu0 0
    %279 = vmatprep.subr.bf16.mxu0 0
    %280 = vmatpush1.bf16.msra.mxu0 %v261
    %281 = vmatprep.subr.bf16.mxu0 0
    %282 = vmatpush1.bf16.msra.mxu0 %v260
    %283 = vmatprep.subr.bf16.mxu0 0
    %284 = vmatpush2.bf16.msra.mxu0 0
    %285 = vmatprep.subr.bf16.mxu0 0
    %286 = vmatpush2.bf16.msra.mxu0 0
    %287 = vmatprep.subr.bf16.mxu0 0
    %288 = vmatpush2.bf16.msra.mxu0 0
    %289 = vmatprep.subr.bf16.mxu0 0
    %290 = vmatpush2.bf16.msra.mxu0 0
    %291 = vmatprep.subr.bf16.mxu0 0
    %292 = vmatpush2.bf16.msra.mxu0 0
    %293 = vmatprep.subr.bf16.mxu0 0
    %294 = vmatpush2.bf16.msra.mxu0 0
    %295 = vmatprep.subr.bf16.mxu0 0
    %296 = vmatpush2.bf16.msra.mxu0 0
    %297 = vmatprep.subr.bf16.mxu0 0
    %298 = vmatpush2.bf16.msra.mxu0 0
    %299 = vmatprep.mubr.bf16.mxu0 0
    %300 = vmatmul.mubr.bf16.gmra.mxu0 %v265
    %v301 = vpop.f32.mrf.mxu0
    %v302 = vadd.f32 0.0, %v301
    %v303 = vpop.f32.mrf.mxu0
    %v304 = vpop.f32.mrf.mxu0
    %v305 = vpop.f32.mrf.mxu0
    %306 = vdwg.mxu0
    %v307 = vunpack.c.l.bf16 %v250
    %v308 = vadd.f32 %v307, %v302
    %v309 = vmul.f32 %v308, %v98
    %v310 = vtanh.pop %v309
    %v311 = vadd.f32 %v310, 1.0
    %v312 = vmul.f32 %v311, 0.5
    %v313 = vsel %vm97, %v310, %v312
    %315 = vrot.lane.b32.xlu0 %v249, 32
    %v316 = vpop.permute.xlu0 %315
    %v318 = vmul.f32 %v313, %v316
    %320 = vrot.lane.b32.xlu0 %v313, 64
    %v321 = vpop.permute.xlu0 %320
    %v323 = vmul.f32 %v313, %v321
    %325 = vrot.lane.b32.xlu0 %v323, 32
    %v326 = vpop.permute.xlu0 %325
    %v328 = vadd.f32 %v318, %v326
    %v329 = vtanh.pop %v328
    %331 = vrot.lane.b32.xlu0 %v329, 64
    %v332 = vpop.permute.xlu0 %331
    %v334 = vmul.f32 %v313, %v332
    %v335 = vpack.c.bf16 %v334, %v334
    %v337 = vunpack.c.l.b16 %v335
    %v338 = vpack.c.b16 %v337, %v337
    %339 = vrot.lane.b32.xlu0 %v338, 32
    %v340 = vpop.permute.xlu0 %339
    %vm342 = vcmask 257024
    %343 = vst.msk [vmem:[#allocation12] sm:$0xf] %vm342, %v340
    %s344 = scalar_lea.vmem [#allocation2], 4
    %v345 = vld [vmem:[%s344] sm:$0xf]
    %346 = vrot.lane.b32.xlu0 %v335, 32
    %v347 = vpop.permute.xlu0 %346
    %v349 = vsel %vm154, %v347, 0
    %351 = vmatprep.subr.bf16.mxu0 0
    %352 = vmatpush1.bf16.msra.mxu0 0
    %353 = vmatprep.subr.bf16.mxu0 0
    %354 = vmatpush1.bf16.msra.mxu0 0
    %355 = vmatprep.subr.bf16.mxu0 0
    %356 = vmatpush1.bf16.msra.mxu0 0
    %357 = vmatprep.subr.bf16.mxu0 0
    %358 = vmatpush1.bf16.msra.mxu0 0
    %359 = vmatprep.subr.bf16.mxu0 0
    %360 = vmatpush1.bf16.msra.mxu0 0
    %361 = vmatprep.subr.bf16.mxu0 0
    %362 = vmatpush1.bf16.msra.mxu0 0
    %363 = vmatprep.subr.bf16.mxu0 0
    %364 = vmatpush1.bf16.msra.mxu0 %v261
    %365 = vmatprep.subr.bf16.mxu0 0
    %366 = vmatpush1.bf16.msra.mxu0 %v260
    %367 = vmatprep.subr.bf16.mxu0 0
    %368 = vmatpush2.bf16.msra.mxu0 0
    %369 = vmatprep.subr.bf16.mxu0 0
    %370 = vmatpush2.bf16.msra.mxu0 0
    %371 = vmatprep.subr.bf16.mxu0 0
    %372 = vmatpush2.bf16.msra.mxu0 0
    %373 = vmatprep.subr.bf16.mxu0 0
    %374 = vmatpush2.bf16.msra.mxu0 0
    %375 = vmatprep.subr.bf16.mxu0 0
    %376 = vmatpush2.bf16.msra.mxu0 0
    %377 = vmatprep.subr.bf16.mxu0 0
    %378 = vmatpush2.bf16.msra.mxu0 0
    %379 = vmatprep.subr.bf16.mxu0 0
    %380 = vmatpush2.bf16.msra.mxu0 0
    %381 = vmatprep.subr.bf16.mxu0 0
    %382 = vmatpush2.bf16.msra.mxu0 0
    %383 = vmatprep.mubr.bf16.mxu0 0
    %384 = vmatmul.mubr.bf16.gmra.mxu0 %v349
    %v385 = vpop.f32.mrf.mxu0
    %v386 = vadd.f32 0.0, %v385
    %v387 = vpop.f32.mrf.mxu0
    %v388 = vpop.f32.mrf.mxu0
    %v389 = vpop.f32.mrf.mxu0
    %390 = vdwg.mxu0
    %v391 = vunpack.c.l.bf16 %v345
    %v392 = vadd.f32 %v391, %v386
    %v393 = vmul.f32 %v392, %v98
    %v394 = vtanh.pop %v393
    %v395 = vadd.f32 %v394, 1.0
    %v396 = vmul.f32 %v395, 0.5
    %v397 = vsel %vm97, %v394, %v396
    %v398 = vmul.f32 %v397, %v328
    %400 = vrot.lane.b32.xlu0 %v397, 64
    %v401 = vpop.permute.xlu0 %400
    %v403 = vmul.f32 %v397, %v401
    %405 = vrot.lane.b32.xlu0 %v403, 32
    %v406 = vpop.permute.xlu0 %405
    %v408 = vadd.f32 %v398, %v406
    %v409 = vtanh.pop %v408
    %411 = vrot.lane.b32.xlu0 %v409, 64
    %v412 = vpop.permute.xlu0 %411
    %v414 = vmul.f32 %v397, %v412
    %v415 = vpack.c.bf16 %v414, %v414
    %v417 = vunpack.c.l.b16 %v415
    %v418 = vpack.c.b16 %v417, %v417
    %419 = vrot.lane.b32.xlu0 %v418, 32
    %v420 = vpop.permute.xlu0 %419
    %s422 = scalar_lea.vmem [#allocation12], 4
    %423 = vst.msk [vmem:[%s422] sm:$0xf] %vm342, %v420
    %s424 = scalar_lea.vmem [#allocation2], 8
    %v425 = vld [vmem:[%s424] sm:$0xf]
    %426 = vrot.lane.b32.xlu0 %v415, 32
    %v427 = vpop.permute.xlu0 %426
    %v429 = vsel %vm154, %v427, 0
    %431 = vmatprep.subr.bf16.mxu0 0
    %432 = vmatpush1.bf16.msra.mxu0 0
    %433 = vmatprep.subr.bf16.mxu0 0
    %434 = vmatpush1.bf16.msra.mxu0 0
    %435 = vmatprep.subr.bf16.mxu0 0
    %436 = vmatpush1.bf16.msra.mxu0 0
    %437 = vmatprep.subr.bf16.mxu0 0
    %438 = vmatpush1.bf16.msra.mxu0 0
    %439 = vmatprep.subr.bf16.mxu0 0
    %440 = vmatpush1.bf16.msra.mxu0 0
    %441 = vmatprep.subr.bf16.mxu0 0
    %442 = vmatpush1.bf16.msra.mxu0 0
    %443 = vmatprep.subr.bf16.mxu0 0
    %444 = vmatpush1.bf16.msra.mxu0 %v261
    %445 = vmatprep.subr.bf16.mxu0 0
    %446 = vmatpush1.bf16.msra.mxu0 %v260
    %447 = vmatprep.subr.bf16.mxu0 0
    %448 = vmatpush2.bf16.msra.mxu0 0
    %449 = vmatprep.subr.bf16.mxu0 0
    %450 = vmatpush2.bf16.msra.mxu0 0
    %451 = vmatprep.subr.bf16.mxu0 0
    %452 = vmatpush2.bf16.msra.mxu0 0
    %453 = vmatprep.subr.bf16.mxu0 0
    %454 = vmatpush2.bf16.msra.mxu0 0
    %455 = vmatprep.subr.bf16.mxu0 0
    %456 = vmatpush2.bf16.msra.mxu0 0
    %457 = vmatprep.subr.bf16.mxu0 0
    %458 = vmatpush2.bf16.msra.mxu0 0
    %459 = vmatprep.subr.bf16.mxu0 0
    %460 = vmatpush2.bf16.msra.mxu0 0
    %461 = vmatprep.subr.bf16.mxu0 0
    %462 = vmatpush2.bf16.msra.mxu0 0
    %463 = vmatprep.mubr.bf16.mxu0 0
    %464 = vmatmul.mubr.bf16.gmra.mxu0 %v429
    %v465 = vpop.f32.mrf.mxu0
    %v466 = vadd.f32 0.0, %v465
    %v467 = vpop.f32.mrf.mxu0
    %v468 = vpop.f32.mrf.mxu0
    %v469 = vpop.f32.mrf.mxu0
    %470 = vdwg.mxu0
    %v471 = vunpack.c.l.bf16 %v425
    %v472 = vadd.f32 %v471, %v466
    %v473 = vmul.f32 %v472, %v98
    %v474 = vtanh.pop %v473
    %v475 = vadd.f32 %v474, 1.0
    %v476 = vmul.f32 %v475, 0.5
    %v477 = vsel %vm97, %v474, %v476
    %v478 = vmul.f32 %v477, %v408
    %480 = vrot.lane.b32.xlu0 %v477, 64
    %v481 = vpop.permute.xlu0 %480
    %v483 = vmul.f32 %v477, %v481
    %485 = vrot.lane.b32.xlu0 %v483, 32
    %v486 = vpop.permute.xlu0 %485
    %v488 = vadd.f32 %v478, %v486
    %v489 = vtanh.pop %v488
    %491 = vrot.lane.b32.xlu0 %v489, 64
    %v492 = vpop.permute.xlu0 %491
    %v494 = vmul.f32 %v477, %v492
    %v495 = vpack.c.bf16 %v494, %v494
    %v497 = vunpack.c.l.b16 %v495
    %v498 = vpack.c.b16 %v497, %v497
    %499 = vrot.lane.b32.xlu0 %v498, 32
    %v500 = vpop.permute.xlu0 %499
    %s502 = scalar_lea.vmem [#allocation12], 8
    %503 = vst.msk [vmem:[%s502] sm:$0xf] %vm342, %v500
    %s504 = scalar_lea.vmem [#allocation2], 12
    %v505 = vld [vmem:[%s504] sm:$0xf]
    %506 = vrot.lane.b32.xlu0 %v495, 32
    %v507 = vpop.permute.xlu0 %506
    %v509 = vsel %vm154, %v507, 0
    %511 = vmatprep.subr.bf16.mxu0 0
    %512 = vmatpush1.bf16.msra.mxu0 0
    %513 = vmatprep.subr.bf16.mxu0 0
    %514 = vmatpush1.bf16.msra.mxu0 0
    %515 = vmatprep.subr.bf16.mxu0 0
    %516 = vmatpush1.bf16.msra.mxu0 0
    %517 = vmatprep.subr.bf16.mxu0 0
    %518 = vmatpush1.bf16.msra.mxu0 0
    %519 = vmatprep.subr.bf16.mxu0 0
    %520 = vmatpush1.bf16.msra.mxu0 0
    %521 = vmatprep.subr.bf16.mxu0 0
    %522 = vmatpush1.bf16.msra.mxu0 0
    %523 = vmatprep.subr.bf16.mxu0 0
    %524 = vmatpush1.bf16.msra.mxu0 %v261
    %525 = vmatprep.subr.bf16.mxu0 0
    %526 = vmatpush1.bf16.msra.mxu0 %v260
    %527 = vmatprep.subr.bf16.mxu0 0
    %528 = vmatpush2.bf16.msra.mxu0 0
    %529 = vmatprep.subr.bf16.mxu0 0
    %530 = vmatpush2.bf16.msra.mxu0 0
    %531 = vmatprep.subr.bf16.mxu0 0
    %532 = vmatpush2.bf16.msra.mxu0 0
    %533 = vmatprep.subr.bf16.mxu0 0
    %534 = vmatpush2.bf16.msra.mxu0 0
    %535 = vmatprep.subr.bf16.mxu0 0
    %536 = vmatpush2.bf16.msra.mxu0 0
    %537 = vmatprep.subr.bf16.mxu0 0
    %538 = vmatpush2.bf16.msra.mxu0 0
    %539 = vmatprep.subr.bf16.mxu0 0
    %540 = vmatpush2.bf16.msra.mxu0 0
    %541 = vmatprep.subr.bf16.mxu0 0
    %542 = vmatpush2.bf16.msra.mxu0 0
    %543 = vmatprep.mubr.bf16.mxu0 0
    %544 = vmatmul.mubr.bf16.gmra.mxu0 %v509
    %v545 = vpop.f32.mrf.mxu0
    %v546 = vadd.f32 0.0, %v545
    %v547 = vpop.f32.mrf.mxu0
    %v548 = vpop.f32.mrf.mxu0
    %v549 = vpop.f32.mrf.mxu0
    %550 = vdwg.mxu0
    %v551 = vunpack.c.l.bf16 %v505
    %v552 = vadd.f32 %v551, %v546
    %v553 = vmul.f32 %v552, %v98
    %v554 = vtanh.pop %v553
    %v555 = vadd.f32 %v554, 1.0
    %v556 = vmul.f32 %v555, 0.5
    %v557 = vsel %vm97, %v554, %v556
    %v558 = vmul.f32 %v557, %v488
    %560 = vrot.lane.b32.xlu0 %v557, 64
    %v561 = vpop.permute.xlu0 %560
    %v563 = vmul.f32 %v557, %v561
    %565 = vrot.lane.b32.xlu0 %v563, 32
    %v566 = vpop.permute.xlu0 %565
    %v568 = vadd.f32 %v558, %v566
    %v569 = vtanh.pop %v568
    %571 = vrot.lane.b32.xlu0 %v569, 64
    %v572 = vpop.permute.xlu0 %571
    %v574 = vmul.f32 %v557, %v572
    %v575 = vpack.c.bf16 %v574, %v574
    %v577 = vunpack.c.l.b16 %v575
    %v578 = vpack.c.b16 %v577, %v577
    %579 = vrot.lane.b32.xlu0 %v578, 32
    %v580 = vpop.permute.xlu0 %579
    %s582 = scalar_lea.vmem [#allocation12], 12
    %583 = vst.msk [vmem:[%s582] sm:$0xf] %vm342, %v580
    %s584 = scalar_lea.vmem [#allocation2], 16
    %v585 = vld [vmem:[%s584] sm:$0xf]
    %586 = vrot.lane.b32.xlu0 %v575, 32
    %v587 = vpop.permute.xlu0 %586
    %v589 = vsel %vm154, %v587, 0
    %591 = vmatprep.subr.bf16.mxu0 0
    %592 = vmatpush1.bf16.msra.mxu0 0
    %593 = vmatprep.subr.bf16.mxu0 0
    %594 = vmatpush1.bf16.msra.mxu0 0
    %595 = vmatprep.subr.bf16.mxu0 0
    %596 = vmatpush1.bf16.msra.mxu0 0
    %597 = vmatprep.subr.bf16.mxu0 0
    %598 = vmatpush1.bf16.msra.mxu0 0
    %599 = vmatprep.subr.bf16.mxu0 0
    %600 = vmatpush1.bf16.msra.mxu0 0
    %601 = vmatprep.subr.bf16.mxu0 0
    %602 = vmatpush1.bf16.msra.mxu0 0
    %603 = vmatprep.subr.bf16.mxu0 0
    %604 = vmatpush1.bf16.msra.mxu0 %v261
    %605 = vmatprep.subr.bf16.mxu0 0
    %606 = vmatpush1.bf16.msra.mxu0 %v260
    %607 = vmatprep.subr.bf16.mxu0 0
    %608 = vmatpush2.bf16.msra.mxu0 0
    %609 = vmatprep.subr.bf16.mxu0 0
    %610 = vmatpush2.bf16.msra.mxu0 0
    %611 = vmatprep.subr.bf16.mxu0 0
    %612 = vmatpush2.bf16.msra.mxu0 0
    %613 = vmatprep.subr.bf16.mxu0 0
    %614 = vmatpush2.bf16.msra.mxu0 0
    %615 = vmatprep.subr.bf16.mxu0 0
    %616 = vmatpush2.bf16.msra.mxu0 0
    %617 = vmatprep.subr.bf16.mxu0 0
    %618 = vmatpush2.bf16.msra.mxu0 0
    %619 = vmatprep.subr.bf16.mxu0 0
    %620 = vmatpush2.bf16.msra.mxu0 0
    %621 = vmatprep.subr.bf16.mxu0 0
    %622 = vmatpush2.bf16.msra.mxu0 0
    %623 = vmatprep.mubr.bf16.mxu0 0
    %624 = vmatmul.mubr.bf16.gmra.mxu0 %v589
    %v625 = vpop.f32.mrf.mxu0
    %v626 = vadd.f32 0.0, %v625
    %v627 = vpop.f32.mrf.mxu0
    %v628 = vpop.f32.mrf.mxu0
    %v629 = vpop.f32.mrf.mxu0
    %630 = vdwg.mxu0
    %v631 = vunpack.c.l.bf16 %v585
    %v632 = vadd.f32 %v631, %v626
    %v633 = vmul.f32 %v632, %v98
    %v634 = vtanh.pop %v633
    %v635 = vadd.f32 %v634, 1.0
    %v636 = vmul.f32 %v635, 0.5
    %v637 = vsel %vm97, %v634, %v636
    %v638 = vmul.f32 %v637, %v568
    %640 = vrot.lane.b32.xlu0 %v637, 64
    %v641 = vpop.permute.xlu0 %640
    %v643 = vmul.f32 %v637, %v641
    %645 = vrot.lane.b32.xlu0 %v643, 32
    %v646 = vpop.permute.xlu0 %645
    %v648 = vadd.f32 %v638, %v646
    %v649 = vtanh.pop %v648
    %651 = vrot.lane.b32.xlu0 %v649, 64
    %v652 = vpop.permute.xlu0 %651
    %v654 = vmul.f32 %v637, %v652
    %v655 = vpack.c.bf16 %v654, %v654
    %v657 = vunpack.c.l.b16 %v655
    %v658 = vpack.c.b16 %v657, %v657
    %659 = vrot.lane.b32.xlu0 %v658, 32
    %v660 = vpop.permute.xlu0 %659
    %s662 = scalar_lea.vmem [#allocation12], 16
    %663 = vst.msk [vmem:[%s662] sm:$0xf] %vm342, %v660
    %s664 = scalar_lea.vmem [#allocation2], 20
    %v665 = vld [vmem:[%s664] sm:$0xf]
    %666 = vrot.lane.b32.xlu0 %v655, 32
    %v667 = vpop.permute.xlu0 %666
    %v669 = vsel %vm154, %v667, 0
    %671 = vmatprep.subr.bf16.mxu0 0
    %672 = vmatpush1.bf16.msra.mxu0 0
    %673 = vmatprep.subr.bf16.mxu0 0
    %674 = vmatpush1.bf16.msra.mxu0 0
    %675 = vmatprep.subr.bf16.mxu0 0
    %676 = vmatpush1.bf16.msra.mxu0 0
    %677 = vmatprep.subr.bf16.mxu0 0
    %678 = vmatpush1.bf16.msra.mxu0 0
    %679 = vmatprep.subr.bf16.mxu0 0
    %680 = vmatpush1.bf16.msra.mxu0 0
    %681 = vmatprep.subr.bf16.mxu0 0
    %682 = vmatpush1.bf16.msra.mxu0 0
    %683 = vmatprep.subr.bf16.mxu0 0
    %684 = vmatpush1.bf16.msra.mxu0 %v261
    %685 = vmatprep.subr.bf16.mxu0 0
    %686 = vmatpush1.bf16.msra.mxu0 %v260
    %687 = vmatprep.subr.bf16.mxu0 0
    %688 = vmatpush2.bf16.msra.mxu0 0
    %689 = vmatprep.subr.bf16.mxu0 0
    %690 = vmatpush2.bf16.msra.mxu0 0
    %691 = vmatprep.subr.bf16.mxu0 0
    %692 = vmatpush2.bf16.msra.mxu0 0
    %693 = vmatprep.subr.bf16.mxu0 0
    %694 = vmatpush2.bf16.msra.mxu0 0
    %695 = vmatprep.subr.bf16.mxu0 0
    %696 = vmatpush2.bf16.msra.mxu0 0
    %697 = vmatprep.subr.bf16.mxu0 0
    %698 = vmatpush2.bf16.msra.mxu0 0
    %699 = vmatprep.subr.bf16.mxu0 0
    %700 = vmatpush2.bf16.msra.mxu0 0
    %701 = vmatprep.subr.bf16.mxu0 0
    %702 = vmatpush2.bf16.msra.mxu0 0
    %703 = vmatprep.mubr.bf16.mxu0 0
    %704 = vmatmul.mubr.bf16.gmra.mxu0 %v669
    %v705 = vpop.f32.mrf.mxu0
    %v706 = vadd.f32 0.0, %v705
    %v707 = vpop.f32.mrf.mxu0
    %v708 = vpop.f32.mrf.mxu0
    %v709 = vpop.f32.mrf.mxu0
    %710 = vdwg.mxu0
    %v711 = vunpack.c.l.bf16 %v665
    %v712 = vadd.f32 %v711, %v706
    %v713 = vmul.f32 %v712, %v98
    %v714 = vtanh.pop %v713
    %v715 = vadd.f32 %v714, 1.0
    %v716 = vmul.f32 %v715, 0.5
    %v717 = vsel %vm97, %v714, %v716
    %v718 = vmul.f32 %v717, %v648
    %720 = vrot.lane.b32.xlu0 %v717, 64
    %v721 = vpop.permute.xlu0 %720
    %v723 = vmul.f32 %v717, %v721
    %725 = vrot.lane.b32.xlu0 %v723, 32
    %v726 = vpop.permute.xlu0 %725
    %v728 = vadd.f32 %v718, %v726
    %v729 = vtanh.pop %v728
    %731 = vrot.lane.b32.xlu0 %v729, 64
    %v732 = vpop.permute.xlu0 %731
    %v734 = vmul.f32 %v717, %v732
    %v735 = vpack.c.bf16 %v734, %v734
    %v737 = vunpack.c.l.b16 %v735
    %v738 = vpack.c.b16 %v737, %v737
    %739 = vrot.lane.b32.xlu0 %v738, 32
    %v740 = vpop.permute.xlu0 %739
    %s742 = scalar_lea.vmem [#allocation12], 20
    %743 = vst.msk [vmem:[%s742] sm:$0xf] %vm342, %v740
    %s744 = scalar_lea.vmem [#allocation2], 24
    %v745 = vld [vmem:[%s744] sm:$0xf]
    %746 = vrot.lane.b32.xlu0 %v735, 32
    %v747 = vpop.permute.xlu0 %746
    %v749 = vsel %vm154, %v747, 0
    %751 = vmatprep.subr.bf16.mxu0 0
    %752 = vmatpush1.bf16.msra.mxu0 0
    %753 = vmatprep.subr.bf16.mxu0 0
    %754 = vmatpush1.bf16.msra.mxu0 0
    %755 = vmatprep.subr.bf16.mxu0 0
    %756 = vmatpush1.bf16.msra.mxu0 0
    %757 = vmatprep.subr.bf16.mxu0 0
    %758 = vmatpush1.bf16.msra.mxu0 0
    %759 = vmatprep.subr.bf16.mxu0 0
    %760 = vmatpush1.bf16.msra.mxu0 0
    %761 = vmatprep.subr.bf16.mxu0 0
    %762 = vmatpush1.bf16.msra.mxu0 0
    %763 = vmatprep.subr.bf16.mxu0 0
    %764 = vmatpush1.bf16.msra.mxu0 %v261
    %765 = vmatprep.subr.bf16.mxu0 0
    %766 = vmatpush1.bf16.msra.mxu0 %v260
    %767 = vmatprep.subr.bf16.mxu0 0
    %768 = vmatpush2.bf16.msra.mxu0 0
    %769 = vmatprep.subr.bf16.mxu0 0
    %770 = vmatpush2.bf16.msra.mxu0 0
    %771 = vmatprep.subr.bf16.mxu0 0
    %772 = vmatpush2.bf16.msra.mxu0 0
    %773 = vmatprep.subr.bf16.mxu0 0
    %774 = vmatpush2.bf16.msra.mxu0 0
    %775 = vmatprep.subr.bf16.mxu0 0
    %776 = vmatpush2.bf16.msra.mxu0 0
    %777 = vmatprep.subr.bf16.mxu0 0
    %778 = vmatpush2.bf16.msra.mxu0 0
    %779 = vmatprep.subr.bf16.mxu0 0
    %780 = vmatpush2.bf16.msra.mxu0 0
    %781 = vmatprep.subr.bf16.mxu0 0
    %782 = vmatpush2.bf16.msra.mxu0 0
    %783 = vmatprep.mubr.bf16.mxu0 0
    %784 = vmatmul.mubr.bf16.gmra.mxu0 %v749
    %v785 = vpop.f32.mrf.mxu0
    %v786 = vadd.f32 0.0, %v785
    %v787 = vpop.f32.mrf.mxu0
    %v788 = vpop.f32.mrf.mxu0
    %v789 = vpop.f32.mrf.mxu0
    %790 = vdwg.mxu0
    %v791 = vunpack.c.l.bf16 %v745
    %v792 = vadd.f32 %v791, %v786
    %v793 = vmul.f32 %v792, %v98
    %v794 = vtanh.pop %v793
    %v795 = vadd.f32 %v794, 1.0
    %v796 = vmul.f32 %v795, 0.5
    %v797 = vsel %vm97, %v794, %v796
    %v798 = vmul.f32 %v797, %v728
    %800 = vrot.lane.b32.xlu0 %v797, 64
    %v801 = vpop.permute.xlu0 %800
    %v803 = vmul.f32 %v797, %v801
    %805 = vrot.lane.b32.xlu0 %v803, 32
    %v806 = vpop.permute.xlu0 %805
    %v808 = vadd.f32 %v798, %v806
    %v809 = vtanh.pop %v808
    %811 = vrot.lane.b32.xlu0 %v809, 64
    %v812 = vpop.permute.xlu0 %811
    %v814 = vmul.f32 %v797, %v812
    %v815 = vpack.c.bf16 %v814, %v814
    %v817 = vunpack.c.l.b16 %v815
    %v818 = vpack.c.b16 %v817, %v817
    %819 = vrot.lane.b32.xlu0 %v818, 32
    %v820 = vpop.permute.xlu0 %819
    %s822 = scalar_lea.vmem [#allocation12], 24
    %823 = vst.msk [vmem:[%s822] sm:$0xf] %vm342, %v820
    %s824 = scalar_lea.vmem [#allocation2], 28
    %v825 = vld [vmem:[%s824] sm:$0xf]
    %826 = vrot.lane.b32.xlu0 %v815, 32
    %v827 = vpop.permute.xlu0 %826
    %v829 = vsel %vm154, %v827, 0
    %831 = vmatprep.subr.bf16.mxu0 0
    %832 = vmatpush1.bf16.msra.mxu0 0
    %833 = vmatprep.subr.bf16.mxu0 0
    %834 = vmatpush1.bf16.msra.mxu0 0
    %835 = vmatprep.subr.bf16.mxu0 0
    %836 = vmatpush1.bf16.msra.mxu0 0
    %837 = vmatprep.subr.bf16.mxu0 0
    %838 = vmatpush1.bf16.msra.mxu0 0
    %839 = vmatprep.subr.bf16.mxu0 0
    %840 = vmatpush1.bf16.msra.mxu0 0
    %841 = vmatprep.subr.bf16.mxu0 0
    %842 = vmatpush1.bf16.msra.mxu0 0
    %843 = vmatprep.subr.bf16.mxu0 0
    %844 = vmatpush1.bf16.msra.mxu0 %v261
    %845 = vmatprep.subr.bf16.mxu0 0
    %846 = vmatpush1.bf16.msra.mxu0 %v260
    %847 = vmatprep.subr.bf16.mxu0 0
    %848 = vmatpush2.bf16.msra.mxu0 0
    %849 = vmatprep.subr.bf16.mxu0 0
    %850 = vmatpush2.bf16.msra.mxu0 0
    %851 = vmatprep.subr.bf16.mxu0 0
    %852 = vmatpush2.bf16.msra.mxu0 0
    %853 = vmatprep.subr.bf16.mxu0 0
    %854 = vmatpush2.bf16.msra.mxu0 0
    %855 = vmatprep.subr.bf16.mxu0 0
    %856 = vmatpush2.bf16.msra.mxu0 0
    %857 = vmatprep.subr.bf16.mxu0 0
    %858 = vmatpush2.bf16.msra.mxu0 0
    %859 = vmatprep.subr.bf16.mxu0 0
    %860 = vmatpush2.bf16.msra.mxu0 0
    %861 = vmatprep.subr.bf16.mxu0 0
    %862 = vmatpush2.bf16.msra.mxu0 0
    %863 = vmatprep.mubr.bf16.mxu0 0
    %864 = vmatmul.mubr.bf16.gmra.mxu0 %v829
    %v865 = vpop.f32.mrf.mxu0
    %v866 = vadd.f32 0.0, %v865
    %v867 = vpop.f32.mrf.mxu0
    %v868 = vpop.f32.mrf.mxu0
    %v869 = vpop.f32.mrf.mxu0
    %870 = vdwg.mxu0
    %v871 = vunpack.c.l.bf16 %v825
    %v872 = vadd.f32 %v871, %v866
    %v873 = vmul.f32 %v872, %v98
    %v874 = vtanh.pop %v873
    %v875 = vadd.f32 %v874, 1.0
    %v876 = vmul.f32 %v875, 0.5
    %v877 = vsel %vm97, %v874, %v876
    %v878 = vmul.f32 %v877, %v808
    %880 = vrot.lane.b32.xlu0 %v877, 64
    %v881 = vpop.permute.xlu0 %880
    %v883 = vmul.f32 %v877, %v881
    %885 = vrot.lane.b32.xlu0 %v883, 32
    %v886 = vpop.permute.xlu0 %885
    %v888 = vadd.f32 %v878, %v886
    %v889 = vtanh.pop %v888
    %891 = vrot.lane.b32.xlu0 %v889, 64
    %v892 = vpop.permute.xlu0 %891
    %v894 = vmul.f32 %v877, %v892
    %v895 = vpack.c.bf16 %v894, %v894
    %v897 = vunpack.c.l.b16 %v895
    %v898 = vpack.c.b16 %v897, %v897
    %899 = vrot.lane.b32.xlu0 %v898, 32
    %v900 = vpop.permute.xlu0 %899
    %s902 = scalar_lea.vmem [#allocation12], 28
    %903 = vst.msk [vmem:[%s902] sm:$0xf] %vm342, %v900
    %s904 = scalar_lea.vmem [#allocation9], 16
    %v905 = vld [vmem:[%s904] sm:$0xf]
    %v906 = vld [vmem:[%s904 + $0x4] sm:$0xf]
    %v907 = vld [vmem:[%s904 + $0x8] sm:$0xf]
    %v908 = vld [vmem:[%s904 + $0xc] sm:$0xf]
    %s909 = scalar_lea.vmem [#allocation11], 16
    %v910 = vld [vmem:[%s909] sm:$0xf]
    %v911 = vld [vmem:[%s909 + $0x4] sm:$0xf]
    %v912 = vld [vmem:[%s909 + $0x8] sm:$0xf]
    %v913 = vld [vmem:[%s909 + $0xc] sm:$0xf]
    %s914 = scalar_lea.vmem %s5, 1
    %v915 = vld [vmem:[%s914] sm:$0x1]
    %v916 = vld [vmem:[#allocation12] sm:$0xf]
    %v917 = vld [vmem:[#allocation12 + $0x4] sm:$0xf]
    %v918 = vld [vmem:[#allocation12 + $0x8] sm:$0xf]
    %v919 = vld [vmem:[#allocation12 + $0xc] sm:$0xf]
    %v920 = vld [vmem:[#allocation12 + $0x10] sm:$0xf]
    %v921 = vld [vmem:[#allocation12 + $0x14] sm:$0xf]
    %v922 = vld [vmem:[#allocation12 + $0x18] sm:$0xf]
    %v923 = vld [vmem:[#allocation12 + $0x1c] sm:$0xf]
    %v925 = vlaneseq
    %v926 = vshrl.u32 %v925, 7
    %v927 = vsub.s32 0, %v926
    %v928 = vrot.slane %v915, %v927
    %v938 = vunpack.c.l.b16 %v916
    %v939 = vunpack.c.l.b16 %v917
    %v940 = vunpack.c.l.b16 %v918
    %v941 = vunpack.c.l.b16 %v919
    %v942 = vunpack.c.l.b16 %v920
    %v943 = vunpack.c.l.b16 %v921
    %v944 = vunpack.c.l.b16 %v922
    %v945 = vunpack.c.l.b16 %v923
    %v946 = vpack.c.b16 %v939, %v938
    %v947 = vpack.c.b16 %v941, %v940
    %v948 = vpack.c.b16 %v943, %v942
    %v949 = vpack.c.b16 %v945, %v944
    %v954 = vunpack.c.l.b16 %v905
    %v955 = vunpack.c.l.b16 %v906
    %v956 = vunpack.c.l.b16 %v907
    %v957 = vunpack.c.l.b16 %v908
    %v958 = vpack.c.b16 %v955, %v954
    %v959 = vpack.c.b16 %v957, %v956
    %v963 = vsel %vm154, %v946, 0
    %v966 = vsel %vm154, %v947, 0
    %v969 = vsel %vm154, %v948, 0
    %v972 = vsel %vm154, %v949, 0
    %974 = vmatprep.subr.bf16.mxu0 0
    %975 = vmatpush1.bf16.msra.mxu0 0
    %976 = vmatprep.subr.bf16.mxu0 0
    %977 = vmatpush1.bf16.msra.mxu0 0
    %978 = vmatprep.subr.bf16.mxu0 0
    %979 = vmatpush1.bf16.msra.mxu0 0
    %980 = vmatprep.subr.bf16.mxu0 0
    %981 = vmatpush1.bf16.msra.mxu0 0
    %982 = vmatprep.subr.bf16.mxu0 0
    %983 = vmatpush1.bf16.msra.mxu0 0
    %984 = vmatprep.subr.bf16.mxu0 0
    %985 = vmatpush1.bf16.msra.mxu0 0
    %986 = vmatprep.subr.bf16.mxu0 0
    %987 = vmatpush1.bf16.msra.mxu0 %v959
    %988 = vmatprep.subr.bf16.mxu0 0
    %989 = vmatpush1.bf16.msra.mxu0 %v958
    %990 = vmatprep.subr.bf16.mxu0 0
    %991 = vmatpush2.bf16.msra.mxu0 0
    %992 = vmatprep.subr.bf16.mxu0 0
    %993 = vmatpush2.bf16.msra.mxu0 0
    %994 = vmatprep.subr.bf16.mxu0 0
    %995 = vmatpush2.bf16.msra.mxu0 0
    %996 = vmatprep.subr.bf16.mxu0 0
    %997 = vmatpush2.bf16.msra.mxu0 0
    %998 = vmatprep.subr.bf16.mxu0 0
    %999 = vmatpush2.bf16.msra.mxu0 0
    %1000 = vmatprep.subr.bf16.mxu0 0
    %1001 = vmatpush2.bf16.msra.mxu0 0
    %1002 = vmatprep.subr.bf16.mxu0 0
    %1003 = vmatpush2.bf16.msra.mxu0 0
    %1004 = vmatprep.subr.bf16.mxu0 0
    %1005 = vmatpush2.bf16.msra.mxu0 0
    %1006 = vmatprep.mubr.bf16.mxu0 0
    %1007 = vmatmul.mubr.bf16.gmra.mxu0 %v963
    %v1008 = vpop.f32.mrf.mxu0
    %v1009 = vadd.f32 %v928, %v1008
    %v1010 = vpop.f32.mrf.mxu0
    %v1011 = vpop.f32.mrf.mxu0
    %v1012 = vadd.f32 %v928, %v1011
    %v1013 = vpop.f32.mrf.mxu0
    %1014 = vmatprep.mubr.bf16.mxu0 0
    %1015 = vmatmul.mubr.bf16.gmra.mxu0 %v966
    %v1016 = vpop.f32.mrf.mxu0
    %v1017 = vadd.f32 %v928, %v1016
    %v1018 = vpop.f32.mrf.mxu0
    %v1019 = vpop.f32.mrf.mxu0
    %v1020 = vadd.f32 %v928, %v1019
    %v1021 = vpop.f32.mrf.mxu0
    %1022 = vmatprep.mubr.bf16.mxu0 0
    %1023 = vmatmul.mubr.bf16.gmra.mxu0 %v969
    %v1024 = vpop.f32.mrf.mxu0
    %v1025 = vadd.f32 %v928, %v1024
    %v1026 = vpop.f32.mrf.mxu0
    %v1027 = vpop.f32.mrf.mxu0
    %v1028 = vadd.f32 %v928, %v1027
    %v1029 = vpop.f32.mrf.mxu0
    %1030 = vmatprep.mubr.bf16.mxu0 0
    %1031 = vmatmul.mubr.bf16.gmra.mxu0 %v972
    %v1032 = vpop.f32.mrf.mxu0
    %v1033 = vadd.f32 %v928, %v1032
    %v1034 = vpop.f32.mrf.mxu0
    %v1035 = vpop.f32.mrf.mxu0
    %v1036 = vadd.f32 %v928, %v1035
    %v1037 = vpop.f32.mrf.mxu0
    %1038 = vdwg.mxu0
    %v1039 = vpack.c.bf16 %v1009, %v1009
    %v1040 = vpack.c.bf16 %v1012, %v1012
    %v1041 = vpack.c.bf16 %v1017, %v1017
    %v1042 = vpack.c.bf16 %v1020, %v1020
    %v1043 = vpack.c.bf16 %v1025, %v1025
    %v1044 = vpack.c.bf16 %v1028, %v1028
    %v1045 = vpack.c.bf16 %v1033, %v1033
    %v1046 = vpack.c.bf16 %v1036, %v1036
    %1047 = vst [vmem:[#allocation2] sm:$0xf] %v1039
    %1048 = vst [vmem:[#allocation2 + $0x4] sm:$0xf] %v1040
    %1049 = vst [vmem:[#allocation2 + $0x8] sm:$0xf] %v1041
    %1050 = vst [vmem:[#allocation2 + $0xc] sm:$0xf] %v1042
    %1051 = vst [vmem:[#allocation2 + $0x10] sm:$0xf] %v1043
    %1052 = vst [vmem:[#allocation2 + $0x14] sm:$0xf] %v1044
    %1053 = vst [vmem:[#allocation2 + $0x18] sm:$0xf] %v1045
    %1054 = vst [vmem:[#allocation2 + $0x1c] sm:$0xf] %v1046
    %s1055 = scalar_lea.vmem [#allocation6], 8
    %v1056 = vld [vmem:[%s1055] sm:$0xff]
    %s1057 = scalar_lea.vmem [#allocation8], 8
    %v1058 = vld [vmem:[%s1057] sm:$0xff]
    %v1059 = vld [vmem:[#allocation2] sm:$0xf]
    %v1060 = vpack.c.bf16 %v1056, %v1056
    %v1065 = vunpack.c.l.b16 %v910
    %v1066 = vunpack.c.l.b16 %v911
    %v1067 = vunpack.c.l.b16 %v912
    %v1068 = vunpack.c.l.b16 %v913
    %v1069 = vpack.c.b16 %v1066, %v1065
    %v1070 = vpack.c.b16 %v1068, %v1067
    %v1074 = vsel %vm154, %v1060, 0
    %1076 = vmatprep.subr.bf16.mxu0 0
    %1077 = vmatpush1.bf16.msra.mxu0 0
    %1078 = vmatprep.subr.bf16.mxu0 0
    %1079 = vmatpush1.bf16.msra.mxu0 0
    %1080 = vmatprep.subr.bf16.mxu0 0
    %1081 = vmatpush1.bf16.msra.mxu0 0
    %1082 = vmatprep.subr.bf16.mxu0 0
    %1083 = vmatpush1.bf16.msra.mxu0 0
    %1084 = vmatprep.subr.bf16.mxu0 0
    %1085 = vmatpush1.bf16.msra.mxu0 0
    %1086 = vmatprep.subr.bf16.mxu0 0
    %1087 = vmatpush1.bf16.msra.mxu0 0
    %1088 = vmatprep.subr.bf16.mxu0 0
    %1089 = vmatpush1.bf16.msra.mxu0 %v1070
    %1090 = vmatprep.subr.bf16.mxu0 0
    %1091 = vmatpush1.bf16.msra.mxu0 %v1069
    %1092 = vmatprep.subr.bf16.mxu0 0
    %1093 = vmatpush2.bf16.msra.mxu0 0
    %1094 = vmatprep.subr.bf16.mxu0 0
    %1095 = vmatpush2.bf16.msra.mxu0 0
    %1096 = vmatprep.subr.bf16.mxu0 0
    %1097 = vmatpush2.bf16.msra.mxu0 0
    %1098 = vmatprep.subr.bf16.mxu0 0
    %1099 = vmatpush2.bf16.msra.mxu0 0
    %1100 = vmatprep.subr.bf16.mxu0 0
    %1101 = vmatpush2.bf16.msra.mxu0 0
    %1102 = vmatprep.subr.bf16.mxu0 0
    %1103 = vmatpush2.bf16.msra.mxu0 0
    %1104 = vmatprep.subr.bf16.mxu0 0
    %1105 = vmatpush2.bf16.msra.mxu0 0
    %1106 = vmatprep.subr.bf16.mxu0 0
    %1107 = vmatpush2.bf16.msra.mxu0 0
    %1108 = vmatprep.mubr.bf16.mxu0 0
    %1109 = vmatmul.mubr.bf16.gmra.mxu0 %v1074
    %v1110 = vpop.f32.mrf.mxu0
    %v1111 = vadd.f32 0.0, %v1110
    %v1112 = vpop.f32.mrf.mxu0
    %v1113 = vpop.f32.mrf.mxu0
    %v1114 = vpop.f32.mrf.mxu0
    %1115 = vdwg.mxu0
    %v1116 = vunpack.c.l.bf16 %v1059
    %v1117 = vadd.f32 %v1116, %v1111
    %v1118 = vmul.f32 %v1117, %v98
    %v1119 = vtanh.pop %v1118
    %v1120 = vadd.f32 %v1119, 1.0
    %v1121 = vmul.f32 %v1120, 0.5
    %v1122 = vsel %vm97, %v1119, %v1121
    %1124 = vrot.lane.b32.xlu0 %v1058, 32
    %v1125 = vpop.permute.xlu0 %1124
    %v1127 = vmul.f32 %v1122, %v1125
    %1129 = vrot.lane.b32.xlu0 %v1122, 64
    %v1130 = vpop.permute.xlu0 %1129
    %v1132 = vmul.f32 %v1122, %v1130
    %1134 = vrot.lane.b32.xlu0 %v1132, 32
    %v1135 = vpop.permute.xlu0 %1134
    %v1137 = vadd.f32 %v1127, %v1135
    %v1138 = vtanh.pop %v1137
    %1140 = vrot.lane.b32.xlu0 %v1138, 64
    %v1141 = vpop.permute.xlu0 %1140
    %v1143 = vmul.f32 %v1122, %v1141
    %v1144 = vpack.c.bf16 %v1143, %v1143
    %v1146 = vunpack.c.l.b16 %v1144
    %v1147 = vpack.c.b16 %v1146, %v1146
    %1148 = vrot.lane.b32.xlu0 %v1147, 32
    %v1149 = vpop.permute.xlu0 %1148
    %1151 = vst.msk [vmem:[#allocation12] sm:$0xf] %vm342, %v1149
    %v1152 = vld [vmem:[%s344] sm:$0xf]
    %1153 = vrot.lane.b32.xlu0 %v1144, 32
    %v1154 = vpop.permute.xlu0 %1153
    %v1156 = vsel %vm154, %v1154, 0
    %1158 = vmatprep.subr.bf16.mxu0 0
    %1159 = vmatpush1.bf16.msra.mxu0 0
    %1160 = vmatprep.subr.bf16.mxu0 0
    %1161 = vmatpush1.bf16.msra.mxu0 0
    %1162 = vmatprep.subr.bf16.mxu0 0
    %1163 = vmatpush1.bf16.msra.mxu0 0
    %1164 = vmatprep.subr.bf16.mxu0 0
    %1165 = vmatpush1.bf16.msra.mxu0 0
    %1166 = vmatprep.subr.bf16.mxu0 0
    %1167 = vmatpush1.bf16.msra.mxu0 0
    %1168 = vmatprep.subr.bf16.mxu0 0
    %1169 = vmatpush1.bf16.msra.mxu0 0
    %1170 = vmatprep.subr.bf16.mxu0 0
    %1171 = vmatpush1.bf16.msra.mxu0 %v1070
    %1172 = vmatprep.subr.bf16.mxu0 0
    %1173 = vmatpush1.bf16.msra.mxu0 %v1069
    %1174 = vmatprep.subr.bf16.mxu0 0
    %1175 = vmatpush2.bf16.msra.mxu0 0
    %1176 = vmatprep.subr.bf16.mxu0 0
    %1177 = vmatpush2.bf16.msra.mxu0 0
    %1178 = vmatprep.subr.bf16.mxu0 0
    %1179 = vmatpush2.bf16.msra.mxu0 0
    %1180 = vmatprep.subr.bf16.mxu0 0
    %1181 = vmatpush2.bf16.msra.mxu0 0
    %1182 = vmatprep.subr.bf16.mxu0 0
    %1183 = vmatpush2.bf16.msra.mxu0 0
    %1184 = vmatprep.subr.bf16.mxu0 0
    %1185 = vmatpush2.bf16.msra.mxu0 0
    %1186 = vmatprep.subr.bf16.mxu0 0
    %1187 = vmatpush2.bf16.msra.mxu0 0
    %1188 = vmatprep.subr.bf16.mxu0 0
    %1189 = vmatpush2.bf16.msra.mxu0 0
    %1190 = vmatprep.mubr.bf16.mxu0 0
    %1191 = vmatmul.mubr.bf16.gmra.mxu0 %v1156
    %v1192 = vpop.f32.mrf.mxu0
    %v1193 = vadd.f32 0.0, %v1192
    %v1194 = vpop.f32.mrf.mxu0
    %v1195 = vpop.f32.mrf.mxu0
    %v1196 = vpop.f32.mrf.mxu0
    %1197 = vdwg.mxu0
    %v1198 = vunpack.c.l.bf16 %v1152
    %v1199 = vadd.f32 %v1198, %v1193
    %v1200 = vmul.f32 %v1199, %v98
    %v1201 = vtanh.pop %v1200
    %v1202 = vadd.f32 %v1201, 1.0
    %v1203 = vmul.f32 %v1202, 0.5
    %v1204 = vsel %vm97, %v1201, %v1203
    %v1205 = vmul.f32 %v1204, %v1137
    %1207 = vrot.lane.b32.xlu0 %v1204, 64
    %v1208 = vpop.permute.xlu0 %1207
    %v1210 = vmul.f32 %v1204, %v1208
    %1212 = vrot.lane.b32.xlu0 %v1210, 32
    %v1213 = vpop.permute.xlu0 %1212
    %v1215 = vadd.f32 %v1205, %v1213
    %v1216 = vtanh.pop %v1215
    %1218 = vrot.lane.b32.xlu0 %v1216, 64
    %v1219 = vpop.permute.xlu0 %1218
    %v1221 = vmul.f32 %v1204, %v1219
    %v1222 = vpack.c.bf16 %v1221, %v1221
    %v1224 = vunpack.c.l.b16 %v1222
    %v1225 = vpack.c.b16 %v1224, %v1224
    %1226 = vrot.lane.b32.xlu0 %v1225, 32
    %v1227 = vpop.permute.xlu0 %1226
    %1229 = vst.msk [vmem:[%s422] sm:$0xf] %vm342, %v1227
    %v1230 = vld [vmem:[%s424] sm:$0xf]
    %1231 = vrot.lane.b32.xlu0 %v1222, 32
    %v1232 = vpop.permute.xlu0 %1231
    %v1234 = vsel %vm154, %v1232, 0
    %1236 = vmatprep.subr.bf16.mxu0 0
    %1237 = vmatpush1.bf16.msra.mxu0 0
    %1238 = vmatprep.subr.bf16.mxu0 0
    %1239 = vmatpush1.bf16.msra.mxu0 0
    %1240 = vmatprep.subr.bf16.mxu0 0
    %1241 = vmatpush1.bf16.msra.mxu0 0
    %1242 = vmatprep.subr.bf16.mxu0 0
    %1243 = vmatpush1.bf16.msra.mxu0 0
    %1244 = vmatprep.subr.bf16.mxu0 0
    %1245 = vmatpush1.bf16.msra.mxu0 0
    %1246 = vmatprep.subr.bf16.mxu0 0
    %1247 = vmatpush1.bf16.msra.mxu0 0
    %1248 = vmatprep.subr.bf16.mxu0 0
    %1249 = vmatpush1.bf16.msra.mxu0 %v1070
    %1250 = vmatprep.subr.bf16.mxu0 0
    %1251 = vmatpush1.bf16.msra.mxu0 %v1069
    %1252 = vmatprep.subr.bf16.mxu0 0
    %1253 = vmatpush2.bf16.msra.mxu0 0
    %1254 = vmatprep.subr.bf16.mxu0 0
    %1255 = vmatpush2.bf16.msra.mxu0 0
    %1256 = vmatprep.subr.bf16.mxu0 0
    %1257 = vmatpush2.bf16.msra.mxu0 0
    %1258 = vmatprep.subr.bf16.mxu0 0
    %1259 = vmatpush2.bf16.msra.mxu0 0
    %1260 = vmatprep.subr.bf16.mxu0 0
    %1261 = vmatpush2.bf16.msra.mxu0 0
    %1262 = vmatprep.subr.bf16.mxu0 0
    %1263 = vmatpush2.bf16.msra.mxu0 0
    %1264 = vmatprep.subr.bf16.mxu0 0
    %1265 = vmatpush2.bf16.msra.mxu0 0
    %1266 = vmatprep.subr.bf16.mxu0 0
    %1267 = vmatpush2.bf16.msra.mxu0 0
    %1268 = vmatprep.mubr.bf16.mxu0 0
    %1269 = vmatmul.mubr.bf16.gmra.mxu0 %v1234
    %v1270 = vpop.f32.mrf.mxu0
    %v1271 = vadd.f32 0.0, %v1270
    %v1272 = vpop.f32.mrf.mxu0
    %v1273 = vpop.f32.mrf.mxu0
    %v1274 = vpop.f32.mrf.mxu0
    %1275 = vdwg.mxu0
    %v1276 = vunpack.c.l.bf16 %v1230
    %v1277 = vadd.f32 %v1276, %v1271
    %v1278 = vmul.f32 %v1277, %v98
    %v1279 = vtanh.pop %v1278
    %v1280 = vadd.f32 %v1279, 1.0
    %v1281 = vmul.f32 %v1280, 0.5
    %v1282 = vsel %vm97, %v1279, %v1281
    %v1283 = vmul.f32 %v1282, %v1215
    %1285 = vrot.lane.b32.xlu0 %v1282, 64
    %v1286 = vpop.permute.xlu0 %1285
    %v1288 = vmul.f32 %v1282, %v1286
    %1290 = vrot.lane.b32.xlu0 %v1288, 32
    %v1291 = vpop.permute.xlu0 %1290
    %v1293 = vadd.f32 %v1283, %v1291
    %v1294 = vtanh.pop %v1293
    %1296 = vrot.lane.b32.xlu0 %v1294, 64
    %v1297 = vpop.permute.xlu0 %1296
    %v1299 = vmul.f32 %v1282, %v1297
    %v1300 = vpack.c.bf16 %v1299, %v1299
    %v1302 = vunpack.c.l.b16 %v1300
    %v1303 = vpack.c.b16 %v1302, %v1302
    %1304 = vrot.lane.b32.xlu0 %v1303, 32
    %v1305 = vpop.permute.xlu0 %1304
    %1307 = vst.msk [vmem:[%s502] sm:$0xf] %vm342, %v1305
    %v1308 = vld [vmem:[%s504] sm:$0xf]
    %1309 = vrot.lane.b32.xlu0 %v1300, 32
    %v1310 = vpop.permute.xlu0 %1309
    %v1312 = vsel %vm154, %v1310, 0
    %1314 = vmatprep.subr.bf16.mxu0 0
    %1315 = vmatpush1.bf16.msra.mxu0 0
    %1316 = vmatprep.subr.bf16.mxu0 0
    %1317 = vmatpush1.bf16.msra.mxu0 0
    %1318 = vmatprep.subr.bf16.mxu0 0
    %1319 = vmatpush1.bf16.msra.mxu0 0
    %1320 = vmatprep.subr.bf16.mxu0 0
    %1321 = vmatpush1.bf16.msra.mxu0 0
    %1322 = vmatprep.subr.bf16.mxu0 0
    %1323 = vmatpush1.bf16.msra.mxu0 0
    %1324 = vmatprep.subr.bf16.mxu0 0
    %1325 = vmatpush1.bf16.msra.mxu0 0
    %1326 = vmatprep.subr.bf16.mxu0 0
    %1327 = vmatpush1.bf16.msra.mxu0 %v1070
    %1328 = vmatprep.subr.bf16.mxu0 0
    %1329 = vmatpush1.bf16.msra.mxu0 %v1069
    %1330 = vmatprep.subr.bf16.mxu0 0
    %1331 = vmatpush2.bf16.msra.mxu0 0
    %1332 = vmatprep.subr.bf16.mxu0 0
    %1333 = vmatpush2.bf16.msra.mxu0 0
    %1334 = vmatprep.subr.bf16.mxu0 0
    %1335 = vmatpush2.bf16.msra.mxu0 0
    %1336 = vmatprep.subr.bf16.mxu0 0
    %1337 = vmatpush2.bf16.msra.mxu0 0
    %1338 = vmatprep.subr.bf16.mxu0 0
    %1339 = vmatpush2.bf16.msra.mxu0 0
    %1340 = vmatprep.subr.bf16.mxu0 0
    %1341 = vmatpush2.bf16.msra.mxu0 0
    %1342 = vmatprep.subr.bf16.mxu0 0
    %1343 = vmatpush2.bf16.msra.mxu0 0
    %1344 = vmatprep.subr.bf16.mxu0 0
    %1345 = vmatpush2.bf16.msra.mxu0 0
    %1346 = vmatprep.mubr.bf16.mxu0 0
    %1347 = vmatmul.mubr.bf16.gmra.mxu0 %v1312
    %v1348 = vpop.f32.mrf.mxu0
    %v1349 = vadd.f32 0.0, %v1348
    %v1350 = vpop.f32.mrf.mxu0
    %v1351 = vpop.f32.mrf.mxu0
    %v1352 = vpop.f32.mrf.mxu0
    %1353 = vdwg.mxu0
    %v1354 = vunpack.c.l.bf16 %v1308
    %v1355 = vadd.f32 %v1354, %v1349
    %v1356 = vmul.f32 %v1355, %v98
    %v1357 = vtanh.pop %v1356
    %v1358 = vadd.f32 %v1357, 1.0
    %v1359 = vmul.f32 %v1358, 0.5
    %v1360 = vsel %vm97, %v1357, %v1359
    %v1361 = vmul.f32 %v1360, %v1293
    %1363 = vrot.lane.b32.xlu0 %v1360, 64
    %v1364 = vpop.permute.xlu0 %1363
    %v1366 = vmul.f32 %v1360, %v1364
    %1368 = vrot.lane.b32.xlu0 %v1366, 32
    %v1369 = vpop.permute.xlu0 %1368
    %v1371 = vadd.f32 %v1361, %v1369
    %v1372 = vtanh.pop %v1371
    %1374 = vrot.lane.b32.xlu0 %v1372, 64
    %v1375 = vpop.permute.xlu0 %1374
    %v1377 = vmul.f32 %v1360, %v1375
    %v1378 = vpack.c.bf16 %v1377, %v1377
    %v1380 = vunpack.c.l.b16 %v1378
    %v1381 = vpack.c.b16 %v1380, %v1380
    %1382 = vrot.lane.b32.xlu0 %v1381, 32
    %v1383 = vpop.permute.xlu0 %1382
    %1385 = vst.msk [vmem:[%s582] sm:$0xf] %vm342, %v1383
    %v1386 = vld [vmem:[%s584] sm:$0xf]
    %1387 = vrot.lane.b32.xlu0 %v1378, 32
    %v1388 = vpop.permute.xlu0 %1387
    %v1390 = vsel %vm154, %v1388, 0
    %1392 = vmatprep.subr.bf16.mxu0 0
    %1393 = vmatpush1.bf16.msra.mxu0 0
    %1394 = vmatprep.subr.bf16.mxu0 0
    %1395 = vmatpush1.bf16.msra.mxu0 0
    %1396 = vmatprep.subr.bf16.mxu0 0
    %1397 = vmatpush1.bf16.msra.mxu0 0
    %1398 = vmatprep.subr.bf16.mxu0 0
    %1399 = vmatpush1.bf16.msra.mxu0 0
    %1400 = vmatprep.subr.bf16.mxu0 0
    %1401 = vmatpush1.bf16.msra.mxu0 0
    %1402 = vmatprep.subr.bf16.mxu0 0
    %1403 = vmatpush1.bf16.msra.mxu0 0
    %1404 = vmatprep.subr.bf16.mxu0 0
    %1405 = vmatpush1.bf16.msra.mxu0 %v1070
    %1406 = vmatprep.subr.bf16.mxu0 0
    %1407 = vmatpush1.bf16.msra.mxu0 %v1069
    %1408 = vmatprep.subr.bf16.mxu0 0
    %1409 = vmatpush2.bf16.msra.mxu0 0
    %1410 = vmatprep.subr.bf16.mxu0 0
    %1411 = vmatpush2.bf16.msra.mxu0 0
    %1412 = vmatprep.subr.bf16.mxu0 0
    %1413 = vmatpush2.bf16.msra.mxu0 0
    %1414 = vmatprep.subr.bf16.mxu0 0
    %1415 = vmatpush2.bf16.msra.mxu0 0
    %1416 = vmatprep.subr.bf16.mxu0 0
    %1417 = vmatpush2.bf16.msra.mxu0 0
    %1418 = vmatprep.subr.bf16.mxu0 0
    %1419 = vmatpush2.bf16.msra.mxu0 0
    %1420 = vmatprep.subr.bf16.mxu0 0
    %1421 = vmatpush2.bf16.msra.mxu0 0
    %1422 = vmatprep.subr.bf16.mxu0 0
    %1423 = vmatpush2.bf16.msra.mxu0 0
    %1424 = vmatprep.mubr.bf16.mxu0 0
    %1425 = vmatmul.mubr.bf16.gmra.mxu0 %v1390
    %v1426 = vpop.f32.mrf.mxu0
    %v1427 = vadd.f32 0.0, %v1426
    %v1428 = vpop.f32.mrf.mxu0
    %v1429 = vpop.f32.mrf.mxu0
    %v1430 = vpop.f32.mrf.mxu0
    %1431 = vdwg.mxu0
    %v1432 = vunpack.c.l.bf16 %v1386
    %v1433 = vadd.f32 %v1432, %v1427
    %v1434 = vmul.f32 %v1433, %v98
    %v1435 = vtanh.pop %v1434
    %v1436 = vadd.f32 %v1435, 1.0
    %v1437 = vmul.f32 %v1436, 0.5
    %v1438 = vsel %vm97, %v1435, %v1437
    %v1439 = vmul.f32 %v1438, %v1371
    %1441 = vrot.lane.b32.xlu0 %v1438, 64
    %v1442 = vpop.permute.xlu0 %1441
    %v1444 = vmul.f32 %v1438, %v1442
    %1446 = vrot.lane.b32.xlu0 %v1444, 32
    %v1447 = vpop.permute.xlu0 %1446
    %v1449 = vadd.f32 %v1439, %v1447
    %v1450 = vtanh.pop %v1449
    %1452 = vrot.lane.b32.xlu0 %v1450, 64
    %v1453 = vpop.permute.xlu0 %1452
    %v1455 = vmul.f32 %v1438, %v1453
    %v1456 = vpack.c.bf16 %v1455, %v1455
    %v1458 = vunpack.c.l.b16 %v1456
    %v1459 = vpack.c.b16 %v1458, %v1458
    %1460 = vrot.lane.b32.xlu0 %v1459, 32
    %v1461 = vpop.permute.xlu0 %1460
    %1463 = vst.msk [vmem:[%s662] sm:$0xf] %vm342, %v1461
    %v1464 = vld [vmem:[%s664] sm:$0xf]
    %1465 = vrot.lane.b32.xlu0 %v1456, 32
    %v1466 = vpop.permute.xlu0 %1465
    %v1468 = vsel %vm154, %v1466, 0
    %1470 = vmatprep.subr.bf16.mxu0 0
    %1471 = vmatpush1.bf16.msra.mxu0 0
    %1472 = vmatprep.subr.bf16.mxu0 0
    %1473 = vmatpush1.bf16.msra.mxu0 0
    %1474 = vmatprep.subr.bf16.mxu0 0
    %1475 = vmatpush1.bf16.msra.mxu0 0
    %1476 = vmatprep.subr.bf16.mxu0 0
    %1477 = vmatpush1.bf16.msra.mxu0 0
    %1478 = vmatprep.subr.bf16.mxu0 0
    %1479 = vmatpush1.bf16.msra.mxu0 0
    %1480 = vmatprep.subr.bf16.mxu0 0
    %1481 = vmatpush1.bf16.msra.mxu0 0
    %1482 = vmatprep.subr.bf16.mxu0 0
    %1483 = vmatpush1.bf16.msra.mxu0 %v1070
    %1484 = vmatprep.subr.bf16.mxu0 0
    %1485 = vmatpush1.bf16.msra.mxu0 %v1069
    %1486 = vmatprep.subr.bf16.mxu0 0
    %1487 = vmatpush2.bf16.msra.mxu0 0
    %1488 = vmatprep.subr.bf16.mxu0 0
    %1489 = vmatpush2.bf16.msra.mxu0 0
    %1490 = vmatprep.subr.bf16.mxu0 0
    %1491 = vmatpush2.bf16.msra.mxu0 0
    %1492 = vmatprep.subr.bf16.mxu0 0
    %1493 = vmatpush2.bf16.msra.mxu0 0
    %1494 = vmatprep.subr.bf16.mxu0 0
    %1495 = vmatpush2.bf16.msra.mxu0 0
    %1496 = vmatprep.subr.bf16.mxu0 0
    %1497 = vmatpush2.bf16.msra.mxu0 0
    %1498 = vmatprep.subr.bf16.mxu0 0
    %1499 = vmatpush2.bf16.msra.mxu0 0
    %1500 = vmatprep.subr.bf16.mxu0 0
    %1501 = vmatpush2.bf16.msra.mxu0 0
    %1502 = vmatprep.mubr.bf16.mxu0 0
    %1503 = vmatmul.mubr.bf16.gmra.mxu0 %v1468
    %v1504 = vpop.f32.mrf.mxu0
    %v1505 = vadd.f32 0.0, %v1504
    %v1506 = vpop.f32.mrf.mxu0
    %v1507 = vpop.f32.mrf.mxu0
    %v1508 = vpop.f32.mrf.mxu0
    %1509 = vdwg.mxu0
    %v1510 = vunpack.c.l.bf16 %v1464
    %v1511 = vadd.f32 %v1510, %v1505
    %v1512 = vmul.f32 %v1511, %v98
    %v1513 = vtanh.pop %v1512
    %v1514 = vadd.f32 %v1513, 1.0
    %v1515 = vmul.f32 %v1514, 0.5
    %v1516 = vsel %vm97, %v1513, %v1515
    %v1517 = vmul.f32 %v1516, %v1449
    %1519 = vrot.lane.b32.xlu0 %v1516, 64
    %v1520 = vpop.permute.xlu0 %1519
    %v1522 = vmul.f32 %v1516, %v1520
    %1524 = vrot.lane.b32.xlu0 %v1522, 32
    %v1525 = vpop.permute.xlu0 %1524
    %v1527 = vadd.f32 %v1517, %v1525
    %v1528 = vtanh.pop %v1527
    %1530 = vrot.lane.b32.xlu0 %v1528, 64
    %v1531 = vpop.permute.xlu0 %1530
    %v1533 = vmul.f32 %v1516, %v1531
    %v1534 = vpack.c.bf16 %v1533, %v1533
    %v1536 = vunpack.c.l.b16 %v1534
    %v1537 = vpack.c.b16 %v1536, %v1536
    %1538 = vrot.lane.b32.xlu0 %v1537, 32
    %v1539 = vpop.permute.xlu0 %1538
    %1541 = vst.msk [vmem:[%s742] sm:$0xf] %vm342, %v1539
    %v1542 = vld [vmem:[%s744] sm:$0xf]
    %1543 = vrot.lane.b32.xlu0 %v1534, 32
    %v1544 = vpop.permute.xlu0 %1543
    %v1546 = vsel %vm154, %v1544, 0
    %1548 = vmatprep.subr.bf16.mxu0 0
    %1549 = vmatpush1.bf16.msra.mxu0 0
    %1550 = vmatprep.subr.bf16.mxu0 0
    %1551 = vmatpush1.bf16.msra.mxu0 0
    %1552 = vmatprep.subr.bf16.mxu0 0
    %1553 = vmatpush1.bf16.msra.mxu0 0
    %1554 = vmatprep.subr.bf16.mxu0 0
    %1555 = vmatpush1.bf16.msra.mxu0 0
    %1556 = vmatprep.subr.bf16.mxu0 0
    %1557 = vmatpush1.bf16.msra.mxu0 0
    %1558 = vmatprep.subr.bf16.mxu0 0
    %1559 = vmatpush1.bf16.msra.mxu0 0
    %1560 = vmatprep.subr.bf16.mxu0 0
    %1561 = vmatpush1.bf16.msra.mxu0 %v1070
    %1562 = vmatprep.subr.bf16.mxu0 0
    %1563 = vmatpush1.bf16.msra.mxu0 %v1069
    %1564 = vmatprep.subr.bf16.mxu0 0
    %1565 = vmatpush2.bf16.msra.mxu0 0
    %1566 = vmatprep.subr.bf16.mxu0 0
    %1567 = vmatpush2.bf16.msra.mxu0 0
    %1568 = vmatprep.subr.bf16.mxu0 0
    %1569 = vmatpush2.bf16.msra.mxu0 0
    %1570 = vmatprep.subr.bf16.mxu0 0
    %1571 = vmatpush2.bf16.msra.mxu0 0
    %1572 = vmatprep.subr.bf16.mxu0 0
    %1573 = vmatpush2.bf16.msra.mxu0 0
    %1574 = vmatprep.subr.bf16.mxu0 0
    %1575 = vmatpush2.bf16.msra.mxu0 0
    %1576 = vmatprep.subr.bf16.mxu0 0
    %1577 = vmatpush2.bf16.msra.mxu0 0
    %1578 = vmatprep.subr.bf16.mxu0 0
    %1579 = vmatpush2.bf16.msra.mxu0 0
    %1580 = vmatprep.mubr.bf16.mxu0 0
    %1581 = vmatmul.mubr.bf16.gmra.mxu0 %v1546
    %v1582 = vpop.f32.mrf.mxu0
    %v1583 = vadd.f32 0.0, %v1582
    %v1584 = vpop.f32.mrf.mxu0
    %v1585 = vpop.f32.mrf.mxu0
    %v1586 = vpop.f32.mrf.mxu0
    %1587 = vdwg.mxu0
    %v1588 = vunpack.c.l.bf16 %v1542
    %v1589 = vadd.f32 %v1588, %v1583
    %v1590 = vmul.f32 %v1589, %v98
    %v1591 = vtanh.pop %v1590
    %v1592 = vadd.f32 %v1591, 1.0
    %v1593 = vmul.f32 %v1592, 0.5
    %v1594 = vsel %vm97, %v1591, %v1593
    %v1595 = vmul.f32 %v1594, %v1527
    %1597 = vrot.lane.b32.xlu0 %v1594, 64
    %v1598 = vpop.permute.xlu0 %1597
    %v1600 = vmul.f32 %v1594, %v1598
    %1602 = vrot.lane.b32.xlu0 %v1600, 32
    %v1603 = vpop.permute.xlu0 %1602
    %v1605 = vadd.f32 %v1595, %v1603
    %v1606 = vtanh.pop %v1605
    %1608 = vrot.lane.b32.xlu0 %v1606, 64
    %v1609 = vpop.permute.xlu0 %1608
    %v1611 = vmul.f32 %v1594, %v1609
    %v1612 = vpack.c.bf16 %v1611, %v1611
    %v1614 = vunpack.c.l.b16 %v1612
    %v1615 = vpack.c.b16 %v1614, %v1614
    %1616 = vrot.lane.b32.xlu0 %v1615, 32
    %v1617 = vpop.permute.xlu0 %1616
    %1619 = vst.msk [vmem:[%s822] sm:$0xf] %vm342, %v1617
    %v1620 = vld [vmem:[%s824] sm:$0xf]
    %1621 = vrot.lane.b32.xlu0 %v1612, 32
    %v1622 = vpop.permute.xlu0 %1621
    %v1624 = vsel %vm154, %v1622, 0
    %1626 = vmatprep.subr.bf16.mxu0 0
    %1627 = vmatpush1.bf16.msra.mxu0 0
    %1628 = vmatprep.subr.bf16.mxu0 0
    %1629 = vmatpush1.bf16.msra.mxu0 0
    %1630 = vmatprep.subr.bf16.mxu0 0
    %1631 = vmatpush1.bf16.msra.mxu0 0
    %1632 = vmatprep.subr.bf16.mxu0 0
    %1633 = vmatpush1.bf16.msra.mxu0 0
    %1634 = vmatprep.subr.bf16.mxu0 0
    %1635 = vmatpush1.bf16.msra.mxu0 0
    %1636 = vmatprep.subr.bf16.mxu0 0
    %1637 = vmatpush1.bf16.msra.mxu0 0
    %1638 = vmatprep.subr.bf16.mxu0 0
    %1639 = vmatpush1.bf16.msra.mxu0 %v1070
    %1640 = vmatprep.subr.bf16.mxu0 0
    %1641 = vmatpush1.bf16.msra.mxu0 %v1069
    %1642 = vmatprep.subr.bf16.mxu0 0
    %1643 = vmatpush2.bf16.msra.mxu0 0
    %1644 = vmatprep.subr.bf16.mxu0 0
    %1645 = vmatpush2.bf16.msra.mxu0 0
    %1646 = vmatprep.subr.bf16.mxu0 0
    %1647 = vmatpush2.bf16.msra.mxu0 0
    %1648 = vmatprep.subr.bf16.mxu0 0
    %1649 = vmatpush2.bf16.msra.mxu0 0
    %1650 = vmatprep.subr.bf16.mxu0 0
    %1651 = vmatpush2.bf16.msra.mxu0 0
    %1652 = vmatprep.subr.bf16.mxu0 0
    %1653 = vmatpush2.bf16.msra.mxu0 0
    %1654 = vmatprep.subr.bf16.mxu0 0
    %1655 = vmatpush2.bf16.msra.mxu0 0
    %1656 = vmatprep.subr.bf16.mxu0 0
    %1657 = vmatpush2.bf16.msra.mxu0 0
    %1658 = vmatprep.mubr.bf16.mxu0 0
    %1659 = vmatmul.mubr.bf16.gmra.mxu0 %v1624
    %v1660 = vpop.f32.mrf.mxu0
    %v1661 = vadd.f32 0.0, %v1660
    %v1662 = vpop.f32.mrf.mxu0
    %v1663 = vpop.f32.mrf.mxu0
    %v1664 = vpop.f32.mrf.mxu0
    %1665 = vdwg.mxu0
    %v1666 = vunpack.c.l.bf16 %v1620
    %v1667 = vadd.f32 %v1666, %v1661
    %v1668 = vmul.f32 %v1667, %v98
    %v1669 = vtanh.pop %v1668
    %v1670 = vadd.f32 %v1669, 1.0
    %v1671 = vmul.f32 %v1670, 0.5
    %v1672 = vsel %vm97, %v1669, %v1671
    %v1673 = vmul.f32 %v1672, %v1605
    %1675 = vrot.lane.b32.xlu0 %v1672, 64
    %v1676 = vpop.permute.xlu0 %1675
    %v1678 = vmul.f32 %v1672, %v1676
    %1680 = vrot.lane.b32.xlu0 %v1678, 32
    %v1681 = vpop.permute.xlu0 %1680
    %v1683 = vadd.f32 %v1673, %v1681
    %v1684 = vtanh.pop %v1683
    %1686 = vrot.lane.b32.xlu0 %v1684, 64
    %v1687 = vpop.permute.xlu0 %1686
    %v1689 = vmul.f32 %v1672, %v1687
    %v1690 = vpack.c.bf16 %v1689, %v1689
    %v1692 = vunpack.c.l.b16 %v1690
    %v1693 = vpack.c.b16 %v1692, %v1692
    %1694 = vrot.lane.b32.xlu0 %v1693, 32
    %v1695 = vpop.permute.xlu0 %1694
    %1697 = vst.msk [vmem:[%s902] sm:$0xf] %vm342, %v1695
    // Predicated region
    $region46: #{tpu_custom_call.1} parent=1 // pred_check
      _
    $region47: #{tpu_custom_call.1} parent=1 // pred_check_branch
      %1699 = sbr.rel (0) target = $region49
    $region48: #{tpu_custom_call.1} parent=1 // pred_region
      %s1701 = ssub.s32 512, 512
      %1702 = vsyncadd [#allocation5], %s1701
      %s1703 = sshll.u32 [#allocation12], 4
      %s1704 = int_to_ptr.vmem [resolvable:$true] %s1703
      %1709 = dma.vmem_to_hbm [thread:$0]  %s1704, 512, %s6, [#allocation5], 64, 64, 4
    $region49: #{tpu_custom_call.1} parent=1 // pred_fallthru
      _
    // Predicated region
    $region50: #{tpu_custom_call.1} parent=1 // pred_check
      _
    $region51: #{tpu_custom_call.1} parent=1 // pred_check_branch
      %1711 = sbr.rel (0) target = $region53
    $region52: #{tpu_custom_call.1} parent=1 // pred_region
      %1712 = dma.done [#allocation5], 512
    $region53: #{tpu_custom_call.1} parent=1 // pred_fallthru
      _
    %1713 = vsyncpa [#allocation4], 1
    %1714 = vsyncpa [#allocation7], 1
    %1715 = vsyncpa [#allocation10], 1
    %1716 = vsyncpa [#allocation5], 1

</llo_original>
